<compile_context>
chip_gen: v6e
topology: v6e:2x2x1
jax: 0.10.0
libtpu: 0.0.40
codegen_flags: <defaults>
</compile_context>

<pallas_src>
import jax
import jax.numpy as jnp
from jax.experimental import pallas as pl
from jax.experimental.pallas import tpu as pltpu

_VMEM_LIMIT = 32 * 1024 * 1024  # <= physical VMEM on v5e/v6e (128 MiB) and v7x (64 MiB)


def _round_up(x, m):
    return (x + m - 1) // m * m


def _cparams():
    return pltpu.CompilerParams(
        dimension_semantics=("parallel",),
        vmem_limit_bytes=_VMEM_LIMIT,
    )


# ---------------------------------------------------------------------------
# Pallas kernels
# ---------------------------------------------------------------------------
def _matmul_bias_relu_kernel(x_ref, w_ref, b_ref, o_ref):
    # x: (bm, K), w: (K, OC), b: (1, OC) -> relu(x @ w + b)
    acc = jnp.dot(x_ref[...], w_ref[...], preferred_element_type=jnp.float32)
    o_ref[...] = jnp.maximum(acc + b_ref[...], 0.0).astype(o_ref.dtype)


def _conv_pool_kernel(x_ref, w_ref, b_ref, o_ref):
    # Fused conv (as matmul over im2col patches) + bias + ReLU + 2x2 max-pool.
    # x: (4, R, K) — the 4 pooling-quadrant patch sets for R pooled positions
    #               (quadrant q = 2*(oh%2) + (ow%2)); w: (K, OC); b: (1, OC);
    # o: (R, OC) — pooled output rows ordered (image, pooled_h, pooled_w).
    # maxpool(relu(z)) == relu(maxpool(z)) (ReLU monotonic), so pool first.
    w = w_ref[...]
    z0 = jnp.dot(x_ref[0], w, preferred_element_type=jnp.float32)
    z1 = jnp.dot(x_ref[1], w, preferred_element_type=jnp.float32)
    z2 = jnp.dot(x_ref[2], w, preferred_element_type=jnp.float32)
    z3 = jnp.dot(x_ref[3], w, preferred_element_type=jnp.float32)
    z = jnp.maximum(jnp.maximum(z0, z1), jnp.maximum(z2, z3))
    o_ref[...] = jnp.maximum(z + b_ref[...], 0.0).astype(o_ref.dtype)


def _fc_logsoftmax_kernel(x_ref, w_ref, b_ref, o_ref):
    # x: (bn, K), w: (K, C), b: (1, C) -> log_softmax(x @ w + b, axis=-1)
    z = jnp.dot(x_ref[...], w_ref[...], preferred_element_type=jnp.float32)
    z = z + b_ref[...]
    m = jnp.max(z, axis=-1, keepdims=True)
    lse = jnp.log(jnp.sum(jnp.exp(z - m), axis=-1, keepdims=True)) + m
    o_ref[...] = (z - lse).astype(o_ref.dtype)


# ---------------------------------------------------------------------------
# Wrappers
# ---------------------------------------------------------------------------
def conv3x3_relu(x_nhwc, w, b, *, block_m=512):
    """Valid 3x3 conv, stride 1 (PyTorch Conv2d defaults), fused bias + ReLU."""
    N, H, W, C = x_nhwc.shape
    KH = KW = 3
    OH, OW = H - KH + 1, W - KW + 1
    OC = w.shape[3]
    K = KH * KW * C

    # im2col (JAX/XLA glue feeding the row-tiled matmul kernel).
    cols = [x_nhwc[:, i:i + OH, j:j + OW, :] for i in range(KH) for j in range(KW)]
    patches = jnp.stack(cols, axis=3).reshape(N * OH * OW, K)

    M = N * OH * OW
    bm = min(block_m, _round_up(M, 8))
    M_pad = _round_up(M, bm)
    if M_pad != M:
        patches = jnp.pad(patches, ((0, M_pad - M), (0, 0)))

    out = pl.pallas_call(
        _matmul_bias_relu_kernel,
        out_shape=jax.ShapeDtypeStruct((M_pad, OC), jnp.float32),
        grid=(M_pad // bm,),
        in_specs=[
            pl.BlockSpec((bm, K), lambda i: (i, 0)),      # row-tiled patches (pipelined)
            pl.BlockSpec((K, OC), lambda i: (0, 0)),      # weights resident
            pl.BlockSpec((1, OC), lambda i: (0, 0)),      # bias resident
        ],
        out_specs=pl.BlockSpec((bm, OC), lambda i: (i, 0)),
        compiler_params=_cparams(),
    )(patches, w.reshape(K, OC), b.reshape(1, OC))
    return out[:M].reshape(N, OH, OW, OC)


def conv3x3_relu_maxpool2(x_nhwc, w, b, *, block_images=16):
    """Valid 3x3 conv (stride 1) + bias + ReLU + MaxPool2d(2) in ONE Pallas pass."""
    N, H, W, C = x_nhwc.shape
    KH = KW = 3
    OH, OW = H - KH + 1, W - KW + 1          # conv output
    PH, PW = OH // 2, OW // 2                # pooled output (floor, PyTorch default)
    OC = w.shape[3]
    K = KH * KW * C

    # im2col (XLA glue), then regroup rows quadrant-major: for each pooled
    # position (n, ph, pw) the four contributing conv positions live at the
    # same row index of four separate (rows, K) slabs, so pooling inside the
    # kernel is a plain elementwise max of four matmul outputs.
    cols = [x_nhwc[:, i:i + OH, j:j + OW, :] for i in range(KH) for j in range(KW)]
    p = jnp.stack(cols, axis=3).reshape(N, OH, OW, K)
    p = p[:, :2 * PH, :2 * PW, :]                            # floor on odd dims
    p = p.reshape(N, PH, 2, PW, 2, K).transpose(2, 4, 0, 1, 3, 5)  # (hq, wq, N, PH, PW, K)

    rows = PH * PW                                            # pooled positions per image
    rows_pad = _round_up(rows, 8)                             # keep sublane dim aligned
    bi = max(1, min(block_images, N))                         # images per grid step
    N_pad = _round_up(N, bi)

    p = p.reshape(4, N, rows, K)
    p = jnp.pad(p, ((0, 0), (0, N_pad - N), (0, rows_pad - rows), (0, 0)))
    p = p.reshape(4, N_pad * rows_pad, K)

    R = bi * rows_pad                                         # rows per grid step
    out = pl.pallas_call(
        _conv_pool_kernel,
        out_shape=jax.ShapeDtypeStruct((N_pad * rows_pad, OC), jnp.float32),
        grid=(N_pad // bi,),
        in_specs=[
            pl.BlockSpec((4, R, K), lambda i: (0, i, 0)),     # 4 quadrant patch slabs
            pl.BlockSpec((K, OC), lambda i: (0, 0)),          # weights resident
            pl.BlockSpec((1, OC), lambda i: (0, 0)),          # bias resident
        ],
        out_specs=pl.BlockSpec((R, OC), lambda i: (i, 0)),
        compiler_params=_cparams(),
    )(p, w.reshape(K, OC), b.reshape(1, OC))

    out = out.reshape(N_pad, rows_pad, OC)[:N, :rows, :]
    return out.reshape(N, PH, PW, OC)


def fc_logsoftmax(x_flat, w, b, *, block_n=256):
    N, K = x_flat.shape
    OC = w.shape[1]
    bn = min(block_n, _round_up(N, 8))
    N_pad = _round_up(N, bn)
    if N_pad != N:
        x_flat = jnp.pad(x_flat, ((0, N_pad - N), (0, 0)))

    out = pl.pallas_call(
        _fc_logsoftmax_kernel,
        out_shape=jax.ShapeDtypeStruct((N_pad, OC), jnp.float32),
        grid=(N_pad // bn,),
        in_specs=[
            pl.BlockSpec((bn, K), lambda i: (i, 0)),
            pl.BlockSpec((K, OC), lambda i: (0, 0)),
            pl.BlockSpec((1, OC), lambda i: (0, 0)),
        ],
        out_specs=pl.BlockSpec((bn, OC), lambda i: (i, 0)),
        compiler_params=_cparams(),
    )(x_flat, w, b.reshape(1, OC))
    return out[:N]


# ---------------------------------------------------------------------------
# Net1 parameters + forward
# ---------------------------------------------------------------------------
def init_params(key, in_ch=1, num_classes=10, hw=16):
    k1, k2, k3 = jax.random.split(key, 3)
    w1 = jax.random.normal(k1, (3, 3, in_ch, 16), jnp.float32) / jnp.sqrt(9.0 * in_ch)
    b1 = jnp.zeros((16,), jnp.float32)
    w2 = jax.random.normal(k2, (3, 3, 16, 32), jnp.float32) / jnp.sqrt(9.0 * 16)
    b2 = jnp.zeros((32,), jnp.float32)
    pooled = (hw - 2 - 2) // 2                      # 16 -> 14 -> 12 -> 6
    fc_in = 32 * pooled * pooled                    # PyTorch NCHW flatten convention
    w3 = jax.random.normal(k3, (fc_in, num_classes), jnp.float32) / jnp.sqrt(float(fc_in))
    b3 = jnp.zeros((num_classes,), jnp.float32)
    return (w1, b1, w2, b2, w3, b3)


def net1_forward(x_nchw, params):
    w1, b1, w2, b2, w3, b3 = params
    x = jnp.transpose(x_nchw, (0, 2, 3, 1))         # NCHW -> NHWC once at the input
    x = conv3x3_relu(x, w1, b1)                     # conv1 + ReLU
    x = conv3x3_relu_maxpool2(x, w2, b2)            # conv2 + ReLU + MaxPool (fused)
    # nn.Dropout(0.25) is an identity at inference time.
    # TODO(synk): training-mode dropout (pltpu.prng_* mask + 1/(1-p) scale) not implemented.
    N, PH, PW, C = x.shape
    x = x.reshape(N, PH * PW * C)                   # free NHWC flatten (no transpose)
    # Fold PyTorch's x.view(N, -1) NCHW ordering into the FC weight rows
    # (trace-time permutation of a tiny (1152, classes) matrix).
    w3_nhwc = w3.reshape(C, PH, PW, -1).transpose(1, 2, 0, 3).reshape(PH * PW * C, -1)
    return fc_logsoftmax(x, w3_nhwc, b3)            # FC + log_softmax (fused)


# ---------------------------------------------------------------------------
# Pure-JAX reference (for correctness checking only)
# ---------------------------------------------------------------------------
def net1_reference(x_nchw, params):
    w1, b1, w2, b2, w3, b3 = params
    dn = ("NHWC", "HWIO", "NHWC")
    y = jnp.transpose(x_nchw, (0, 2, 3, 1))
    y = jnp.maximum(jax.lax.conv_general_dilated(y, w1, (1, 1), "VALID",
                                                 dimension_numbers=dn) + b1, 0.0)
    y = jnp.maximum(jax.lax.conv_general_dilated(y, w2, (1, 1), "VALID",
                                                 dimension_numbers=dn) + b2, 0.0)
    N, H, W, C = y.shape
    y = y[:, :H // 2 * 2, :W // 2 * 2, :].reshape(N, H // 2, 2, W // 2, 2, C).max(axis=(2, 4))
    y = jnp.transpose(y, (0, 3, 1, 2)).reshape(N, -1)        # PyTorch NCHW flatten
    z = y @ w3 + b3
    return jax.nn.log_softmax(z, axis=-1)


if __name__ == "__main__":
    key = jax.random.PRNGKey(0)
    kx, kp = jax.random.split(key)
    x = jax.random.normal(kx, (2, 1, 16, 16), jnp.float32)   # NCHW, MNIST-like small
    params = init_params(kp, in_ch=1, num_classes=10, hw=16)

    fwd = jax.jit(net1_forward)
    out = jax.block_until_ready(fwd(x, params))

    assert out.shape == (2, 10), out.shape
    # log_softmax sanity: probabilities along last axis sum to 1
    probs_sum = jnp.sum(jnp.exp(out), axis=-1)
    assert jnp.allclose(probs_sum, 1.0, atol=1e-4), probs_sum
    # full-forward check against the pure-JAX reference
    ref = jax.block_until_ready(jax.jit(net1_reference)(x, params))
    assert jnp.allclose(out, ref, atol=2e-2), jnp.max(jnp.abs(out - ref))
    print("KERNEL_OK")
</pallas_src>

<mosaic_0001>
module attributes {stable_mosaic.version = 11 : i64} {
  func.func @_matmul_bias_relu_kernel(%arg0: i32, %arg1: memref<392x9xf32, #tpu.memory_space<vmem>>, %arg2: memref<9x16xf32, #tpu.memory_space<vmem>>, %arg3: memref<1x16xf32, #tpu.memory_space<vmem>>, %arg4: memref<392x16xf32, #tpu.memory_space<vmem>>) attributes {dimension_semantics = [#tpu.dimension_semantics<parallel>], iteration_bounds = array<i64: 1>, scalar_prefetch = 0 : i64, scratch_operands = 0 : i64, tpu.core_type = #tpu.core_type<tc>, window_params = [{transform_indices = @transform_0, window_bounds = array<i64: 392, 9>}, {pipeline_mode = #tpu.pipeline_mode<synchronous>, transform_indices = @transform_1, window_bounds = array<i64: 9, 16>}, {pipeline_mode = #tpu.pipeline_mode<synchronous>, transform_indices = @transform_2, window_bounds = array<i64: 1, 16>}, {transform_indices = @transform_3, window_bounds = array<i64: 392, 16>}]} {
    %c0 = arith.constant 0 : index
    %c0_0 = arith.constant 0 : index
    %0 = vector.load %arg1[%c0, %c0_0] : memref<392x9xf32, #tpu.memory_space<vmem>>, vector<392x9xf32>
    %c0_1 = arith.constant 0 : index
    %c0_2 = arith.constant 0 : index
    %1 = vector.load %arg2[%c0_1, %c0_2] : memref<9x16xf32, #tpu.memory_space<vmem>>, vector<9x16xf32>
    %cst = arith.constant dense<0.000000e+00> : vector<392x16xf32>
    %2 = tpu.matmul %0, %1, %cst {dimension_numbers = #tpu.dot_dimension_numbers<[1], [0], [0], [1], [0, 0, 1, 1], [], []>} : vector<392x9xf32>, vector<9x16xf32>, vector<392x16xf32> -> vector<392x16xf32>
    %c0_3 = arith.constant 0 : index
    %c0_4 = arith.constant 0 : index
    %3 = vector.load %arg3[%c0_3, %c0_4] : memref<1x16xf32, #tpu.memory_space<vmem>>, vector<1x16xf32>
    %4 = vector.broadcast %3 : vector<1x16xf32> to vector<392x16xf32>
    %5 = arith.addf %2, %4 : vector<392x16xf32>
    %cst_5 = arith.constant 0.000000e+00 : f32
    %6 = vector.broadcast %cst_5 : f32 to vector<392x16xf32>
    %7 = arith.maximumf %5, %6 : vector<392x16xf32>
    %c0_6 = arith.constant 0 : index
    %c0_7 = arith.constant 0 : index
    %8 = vector.load %arg4[%c0_6, %c0_7] : memref<392x16xf32, #tpu.memory_space<vmem>>, vector<392x16xf32>
    tpu.vector_store %arg4[%c0_6, %c0_7], %7 {strides = array<i32>} : memref<392x16xf32, #tpu.memory_space<vmem>>, vector<392x16xf32>,
    return
  }
  func.func @transform_0(%arg0: i32) -> (i32, i32) {
    %c0_i32 = arith.constant 0 : i32
    %c0_i32_0 = arith.constant 0 : i32
    return %arg0, %c0_i32 : i32, i32
  }
  func.func @transform_1(%arg0: i32) -> (i32, i32) {
    %c0_i32 = arith.constant 0 : i32
    %c0_i32_0 = arith.constant 0 : i32
    %c0_i32_1 = arith.constant 0 : i32
    return %c0_i32, %c0_i32_0 : i32, i32
  }
  func.func @transform_2(%arg0: i32) -> (i32, i32) {
    %c0_i32 = arith.constant 0 : i32
    %c0_i32_0 = arith.constant 0 : i32
    %c0_i32_1 = arith.constant 0 : i32
    return %c0_i32, %c0_i32_0 : i32, i32
  }
  func.func @transform_3(%arg0: i32) -> (i32, i32) {
    %c0_i32 = arith.constant 0 : i32
    %c0_i32_0 = arith.constant 0 : i32
    return %arg0, %c0_i32 : i32, i32
  }
}

module attributes {stable_mosaic.version = 11 : i64} {
  func.func @_conv_pool_kernel(%arg0: i32, %arg1: memref<4x80x144xf32, #tpu.memory_space<vmem>>, %arg2: memref<144x32xf32, #tpu.memory_space<vmem>>, %arg3: memref<1x32xf32, #tpu.memory_space<vmem>>, %arg4: memref<80x32xf32, #tpu.memory_space<vmem>>) attributes {dimension_semantics = [#tpu.dimension_semantics<parallel>], iteration_bounds = array<i64: 1>, scalar_prefetch = 0 : i64, scratch_operands = 0 : i64, tpu.core_type = #tpu.core_type<tc>, window_params = [{transform_indices = @transform_0, window_bounds = array<i64: 4, 80, 144>}, {pipeline_mode = #tpu.pipeline_mode<synchronous>, transform_indices = @transform_1, window_bounds = array<i64: 144, 32>}, {pipeline_mode = #tpu.pipeline_mode<synchronous>, transform_indices = @transform_2, window_bounds = array<i64: 1, 32>}, {transform_indices = @transform_3, window_bounds = array<i64: 80, 32>}]} {
    %c0 = arith.constant 0 : index
    %c0_0 = arith.constant 0 : index
    %0 = vector.load %arg2[%c0, %c0_0] : memref<144x32xf32, #tpu.memory_space<vmem>>, vector<144x32xf32>
    %c0_1 = arith.constant 0 : index
    %c0_2 = arith.constant 0 : index
    %c0_3 = arith.constant 0 : index
    %1 = vector.load %arg1[%c0_1, %c0_2, %c0_3] : memref<4x80x144xf32, #tpu.memory_space<vmem>>, vector<1x80x144xf32>
    %2 = vector.shape_cast %1 : vector<1x80x144xf32> to vector<80x144xf32>
    %cst = arith.constant dense<0.000000e+00> : vector<80x32xf32>
    %3 = tpu.matmul %2, %0, %cst {dimension_numbers = #tpu.dot_dimension_numbers<[1], [0], [0], [1], [0, 0, 1, 1], [], []>} : vector<80x144xf32>, vector<144x32xf32>, vector<80x32xf32> -> vector<80x32xf32>
    %c1 = arith.constant 1 : index
    %c0_4 = arith.constant 0 : index
    %c0_5 = arith.constant 0 : index
    %4 = vector.load %arg1[%c1, %c0_4, %c0_5] : memref<4x80x144xf32, #tpu.memory_space<vmem>>, vector<1x80x144xf32>
    %5 = vector.shape_cast %4 : vector<1x80x144xf32> to vector<80x144xf32>
    %cst_6 = arith.constant dense<0.000000e+00> : vector<80x32xf32>
    %6 = tpu.matmul %5, %0, %cst_6 {dimension_numbers = #tpu.dot_dimension_numbers<[1], [0], [0], [1], [0, 0, 1, 1], [], []>} : vector<80x144xf32>, vector<144x32xf32>, vector<80x32xf32> -> vector<80x32xf32>
    %c2 = arith.constant 2 : index
    %c0_7 = arith.constant 0 : index
    %c0_8 = arith.constant 0 : index
    %7 = vector.load %arg1[%c2, %c0_7, %c0_8] : memref<4x80x144xf32, #tpu.memory_space<vmem>>, vector<1x80x144xf32>
    %8 = vector.shape_cast %7 : vector<1x80x144xf32> to vector<80x144xf32>
    %cst_9 = arith.constant dense<0.000000e+00> : vector<80x32xf32>
    %9 = tpu.matmul %8, %0, %cst_9 {dimension_numbers = #tpu.dot_dimension_numbers<[1], [0], [0], [1], [0, 0, 1, 1], [], []>} : vector<80x144xf32>, vector<144x32xf32>, vector<80x32xf32> -> vector<80x32xf32>
    %c3 = arith.constant 3 : index
    %c0_10 = arith.constant 0 : index
    %c0_11 = arith.constant 0 : index
    %10 = vector.load %arg1[%c3, %c0_10, %c0_11] : memref<4x80x144xf32, #tpu.memory_space<vmem>>, vector<1x80x144xf32>
    %11 = vector.shape_cast %10 : vector<1x80x144xf32> to vector<80x144xf32>
    %cst_12 = arith.constant dense<0.000000e+00> : vector<80x32xf32>
    %12 = tpu.matmul %11, %0, %cst_12 {dimension_numbers = #tpu.dot_dimension_numbers<[1], [0], [0], [1], [0, 0, 1, 1], [], []>} : vector<80x144xf32>, vector<144x32xf32>, vector<80x32xf32> -> vector<80x32xf32>
    %13 = arith.maximumf %3, %6 : vector<80x32xf32>
    %14 = arith.maximumf %9, %12 : vector<80x32xf32>
    %15 = arith.maximumf %13, %14 : vector<80x32xf32>
    %c0_13 = arith.constant 0 : index
    %c0_14 = arith.constant 0 : index
    %16 = vector.load %arg3[%c0_13, %c0_14] : memref<1x32xf32, #tpu.memory_space<vmem>>, vector<1x32xf32>
    %17 = vector.broadcast %16 : vector<1x32xf32> to vector<80x32xf32>
    %18 = arith.addf %15, %17 : vector<80x32xf32>
    %cst_15 = arith.constant 0.000000e+00 : f32
    %19 = vector.broadcast %cst_15 : f32 to vector<80x32xf32>
    %20 = arith.maximumf %18, %19 : vector<80x32xf32>
    %c0_16 = arith.constant 0 : index
    %c0_17 = arith.constant 0 : index
    %21 = vector.load %arg4[%c0_16, %c0_17] : memref<80x32xf32, #tpu.memory_space<vmem>>, vector<80x32xf32>
    tpu.vector_store %arg4[%c0_16, %c0_17], %20 {strides = array<i32>} : memref<80x32xf32, #tpu.memory_space<vmem>>, vector<80x32xf32>,
    return
  }
  func.func @transform_0(%arg0: i32) -> (i32, i32, i32) {
    %c0_i32 = arith.constant 0 : i32
    %c0_i32_0 = arith.constant 0 : i32
    %c0_i32_1 = arith.constant 0 : i32
    return %c0_i32, %arg0, %c0_i32_0 : i32, i32, i32
  }
  func.func @transform_1(%arg0: i32) -> (i32, i32) {
    %c0_i32 = arith.constant 0 : i32
    %c0_i32_0 = arith.constant 0 : i32
    %c0_i32_1 = arith.constant 0 : i32
    return %c0_i32, %c0_i32_0 : i32, i32
  }
  func.func @transform_2(%arg0: i32) -> (i32, i32) {
    %c0_i32 = arith.constant 0 : i32
    %c0_i32_0 = arith.constant 0 : i32
    %c0_i32_1 = arith.constant 0 : i32
    return %c0_i32, %c0_i32_0 : i32, i32
  }
  func.func @transform_3(%arg0: i32) -> (i32, i32) {
    %c0_i32 = arith.constant 0 : i32
    %c0_i32_0 = arith.constant 0 : i32
    return %arg0, %c0_i32 : i32, i32
  }
}

module attributes {stable_mosaic.version = 11 : i64} {
  func.func @_fc_logsoftmax_kernel(%arg0: i32, %arg1: memref<8x1152xf32, #tpu.memory_space<vmem>>, %arg2: memref<1152x10xf32, #tpu.memory_space<vmem>>, %arg3: memref<1x10xf32, #tpu.memory_space<vmem>>, %arg4: memref<8x10xf32, #tpu.memory_space<vmem>>) attributes {dimension_semantics = [#tpu.dimension_semantics<parallel>], iteration_bounds = array<i64: 1>, scalar_prefetch = 0 : i64, scratch_operands = 0 : i64, tpu.core_type = #tpu.core_type<tc>, window_params = [{transform_indices = @transform_0, window_bounds = array<i64: 8, 1152>}, {pipeline_mode = #tpu.pipeline_mode<synchronous>, transform_indices = @transform_1, window_bounds = array<i64: 1152, 10>}, {pipeline_mode = #tpu.pipeline_mode<synchronous>, transform_indices = @transform_2, window_bounds = array<i64: 1, 10>}, {transform_indices = @transform_3, window_bounds = array<i64: 8, 10>}]} {
    %c0 = arith.constant 0 : index
    %c0_0 = arith.constant 0 : index
    %0 = vector.load %arg1[%c0, %c0_0] : memref<8x1152xf32, #tpu.memory_space<vmem>>, vector<8x1152xf32>
    %c0_1 = arith.constant 0 : index
    %c0_2 = arith.constant 0 : index
    %1 = vector.load %arg2[%c0_1, %c0_2] : memref<1152x10xf32, #tpu.memory_space<vmem>>, vector<1152x10xf32>
    %cst = arith.constant dense<0.000000e+00> : vector<8x10xf32>
    %2 = tpu.matmul %0, %1, %cst {dimension_numbers = #tpu.dot_dimension_numbers<[1], [0], [0], [1], [0, 0, 1, 1], [], []>} : vector<8x1152xf32>, vector<1152x10xf32>, vector<8x10xf32> -> vector<8x10xf32>
    %c0_3 = arith.constant 0 : index
    %c0_4 = arith.constant 0 : index
    %3 = vector.load %arg3[%c0_3, %c0_4] : memref<1x10xf32, #tpu.memory_space<vmem>>, vector<1x10xf32>
    %4 = vector.broadcast %3 : vector<1x10xf32> to vector<8x10xf32>
    %5 = arith.addf %2, %4 : vector<8x10xf32>
    %cst_5 = arith.constant dense<0xFF800000> : vector<8xf32>
    %6 = vector.multi_reduction <maximumf>, %5, %cst_5 [1] : vector<8x10xf32> to vector<8xf32>
    %7 = vector.shape_cast %6 : vector<8xf32> to vector<8x1xf32>
    %8 = vector.broadcast %7 : vector<8x1xf32> to vector<8x10xf32>
    %9 = arith.subf %5, %8 : vector<8x10xf32>
    %10 = math.exp %9 : vector<8x10xf32>
    %cst_6 = arith.constant dense<0.000000e+00> : vector<8xf32>
    %11 = vector.multi_reduction <add>, %10, %cst_6 [1] : vector<8x10xf32> to vector<8xf32>
    %12 = vector.shape_cast %11 : vector<8xf32> to vector<8x1xf32>
    %13 = math.log %12 : vector<8x1xf32>
    %14 = arith.addf %13, %7 : vector<8x1xf32>
    %15 = vector.broadcast %14 : vector<8x1xf32> to vector<8x10xf32>
    %16 = arith.subf %5, %15 : vector<8x10xf32>
    %c0_7 = arith.constant 0 : index
    %c0_8 = arith.constant 0 : index
    %17 = vector.load %arg4[%c0_7, %c0_8] : memref<8x10xf32, #tpu.memory_space<vmem>>, vector<8x10xf32>
    tpu.vector_store %arg4[%c0_7, %c0_8], %16 {strides = array<i32>} : memref<8x10xf32, #tpu.memory_space<vmem>>, vector<8x10xf32>,
    return
  }
  func.func @transform_0(%arg0: i32) -> (i32, i32) {
    %c0_i32 = arith.constant 0 : i32
    %c0_i32_0 = arith.constant 0 : i32
    return %arg0, %c0_i32 : i32, i32
  }
  func.func @transform_1(%arg0: i32) -> (i32, i32) {
    %c0_i32 = arith.constant 0 : i32
    %c0_i32_0 = arith.constant 0 : i32
    %c0_i32_1 = arith.constant 0 : i32
    return %c0_i32, %c0_i32_0 : i32, i32
  }
  func.func @transform_2(%arg0: i32) -> (i32, i32) {
    %c0_i32 = arith.constant 0 : i32
    %c0_i32_0 = arith.constant 0 : i32
    %c0_i32_1 = arith.constant 0 : i32
    return %c0_i32, %c0_i32_0 : i32, i32
  }
  func.func @transform_3(%arg0: i32) -> (i32, i32) {
    %c0_i32 = arith.constant 0 : i32
    %c0_i32_0 = arith.constant 0 : i32
    return %arg0, %c0_i32 : i32, i32
  }
}

</mosaic_0001>

<llo_original>
// kernel: net1_forward.3
$region0: #{net1_forward.3}
  #allocation0 [shape = 'u32[]', space=smem, size = 0x4, offset = 0x4, fixed_abs, tag = 'smem constant byte address 0x4 - core index']
  #allocation1 [shape = 'u32[144,128]{1,0:T(1,128)}', space=vmem, size = 0x12000, scoped, tag = 'internal scratch']
  %s0 = inlined_call_operand.vmem [shape: f32[392,9], index: 0, kind: input, shape index: {}]
  %s1 = inlined_call_operand.vmem [shape: f32[9,16], index: 1, kind: input, shape index: {}]
  %s2 = inlined_call_operand.hbm [shape: f32[1,16], index: 2, kind: input, shape index: {}]
  %s3 = inlined_call_operand.vmem [shape: f32[392,16], index: 3, kind: output, shape index: {}]
  %s4 = sld [smem:[#allocation0]]
  $region26: #{net1_forward.3} parent=0
    _
  %s6 = ssub.s32 1, %s4
  %s7 = scalar_select 0, %s6, %s4
  $region1: #{net1_forward.3} parent=0
    #allocation2 [shape = 'u8[512]{0}', space=vmem, size = 0x400, scoped, tag = 'input window, operand 2, single buffered']
    #allocation3 [shape = 's32[1]{0}', space=sflag, size = 0x4, scoped, tag = 'scoped memory for net1_forward.3']
    %8 = vsyncpa [#allocation3], 0
    // Predicated region
    $region2: #{net1_forward.3} parent=1 // pred_check
      _
    $region3: #{net1_forward.3} parent=1 // pred_check_branch
      %10 = sbr.rel (0) target = $region5
    $region4: #{net1_forward.3} parent=1 // pred_region
      _
    $region5: #{net1_forward.3} parent=1 // pred_fallthru
      _
    // Predicated region
    $region6: #{net1_forward.3} parent=1 // pred_check
      _
    $region7: #{net1_forward.3} parent=1 // pred_check_branch
      %12 = sbr.rel (0) target = $region9
    $region8: #{net1_forward.3} parent=1 // pred_region
      _
    $region9: #{net1_forward.3} parent=1 // pred_fallthru
      _
    // Predicated region
    $region10: #{net1_forward.3} parent=1 // pred_check
      _
    $region11: #{net1_forward.3} parent=1 // pred_check_branch
      %14 = sbr.rel (0) target = $region13
    $region12: #{net1_forward.3} parent=1 // pred_region
      %s16 = ssub.s32 16, 16
      %17 = vsyncadd [#allocation3], %s16
      %s19 = sshll.u32 [#allocation2], 4
      %s20 = int_to_ptr.vmem [resolvable:$true] %s19
      %22 = dma.hbm_to_vmem [thread:$0]  %s2, 16, %s20, [#allocation3]
    $region13: #{net1_forward.3} parent=1 // pred_fallthru
      _
    // Predicated region
    $region14: #{net1_forward.3} parent=1 // pred_check
      _
    $region15: #{net1_forward.3} parent=1 // pred_check_branch
      %24 = sbr.rel (0) target = $region17
    $region16: #{net1_forward.3} parent=1 // pred_region
      %25 = dma.done [#allocation3], 16
    $region17: #{net1_forward.3} parent=1 // pred_fallthru
      _
    %v26 = vld [vmem:[%s0] sm:$0xff]
    %v27 = vld [vmem:[%s0 + $0x8] sm:$0xff]
    %v28 = vld [vmem:[%s0 + $0x10] sm:$0xff]
    %v29 = vld [vmem:[%s0 + $0x18] sm:$0xff]
    %v30 = vld [vmem:[%s0 + $0x20] sm:$0xff]
    %v31 = vld [vmem:[%s0 + $0x28] sm:$0xff]
    %v32 = vld [vmem:[%s0 + $0x30] sm:$0xff]
    %v33 = vld [vmem:[%s0 + $0x38] sm:$0xff]
    %v34 = vld [vmem:[%s0 + $0x40] sm:$0xff]
    %v35 = vld [vmem:[%s0 + $0x48] sm:$0xff]
    %v36 = vld [vmem:[%s0 + $0x50] sm:$0xff]
    %v37 = vld [vmem:[%s0 + $0x58] sm:$0xff]
    %v38 = vld [vmem:[%s0 + $0x60] sm:$0xff]
    %v39 = vld [vmem:[%s0 + $0x68] sm:$0xff]
    %v40 = vld [vmem:[%s0 + $0x70] sm:$0xff]
    %v41 = vld [vmem:[%s0 + $0x78] sm:$0xff]
    %v42 = vld [vmem:[%s0 + $0x80] sm:$0xff]
    %v43 = vld [vmem:[%s0 + $0x88] sm:$0xff]
    %v44 = vld [vmem:[%s0 + $0x90] sm:$0xff]
    %v45 = vld [vmem:[%s0 + $0x98] sm:$0xff]
    %v46 = vld [vmem:[%s0 + $0xa0] sm:$0xff]
    %v47 = vld [vmem:[%s0 + $0xa8] sm:$0xff]
    %v48 = vld [vmem:[%s0 + $0xb0] sm:$0xff]
    %v49 = vld [vmem:[%s0 + $0xb8] sm:$0xff]
    %v50 = vld [vmem:[%s0 + $0xc0] sm:$0xff]
    %v51 = vld [vmem:[%s0 + $0xc8] sm:$0xff]
    %v52 = vld [vmem:[%s0 + $0xd0] sm:$0xff]
    %v53 = vld [vmem:[%s0 + $0xd8] sm:$0xff]
    %v54 = vld [vmem:[%s0 + $0xe0] sm:$0xff]
    %v55 = vld [vmem:[%s0 + $0xe8] sm:$0xff]
    %v56 = vld [vmem:[%s0 + $0xf0] sm:$0xff]
    %v57 = vld [vmem:[%s0 + $0xf8] sm:$0xff]
    %v58 = vld [vmem:[%s0 + $0x100] sm:$0xff]
    %v59 = vld [vmem:[%s0 + $0x108] sm:$0xff]
    %v60 = vld [vmem:[%s0 + $0x110] sm:$0xff]
    %v61 = vld [vmem:[%s0 + $0x118] sm:$0xff]
    %v62 = vld [vmem:[%s0 + $0x120] sm:$0xff]
    %v63 = vld [vmem:[%s0 + $0x128] sm:$0xff]
    %v64 = vld [vmem:[%s0 + $0x130] sm:$0xff]
    %v65 = vld [vmem:[%s0 + $0x138] sm:$0xff]
    %v66 = vld [vmem:[%s0 + $0x140] sm:$0xff]
    %v67 = vld [vmem:[%s0 + $0x148] sm:$0xff]
    %v68 = vld [vmem:[%s0 + $0x150] sm:$0xff]
    %v69 = vld [vmem:[%s0 + $0x158] sm:$0xff]
    %v70 = vld [vmem:[%s0 + $0x160] sm:$0xff]
    %v71 = vld [vmem:[%s0 + $0x168] sm:$0xff]
    %v72 = vld [vmem:[%s0 + $0x170] sm:$0xff]
    %v73 = vld [vmem:[%s0 + $0x178] sm:$0xff]
    %v74 = vld [vmem:[%s0 + $0x180] sm:$0xff]
    %v75 = vld [vmem:[%s1] sm:$0xff]
    %v76 = vld [vmem:[%s1 + $0x8] sm:$0x1]
    %v77 = vld [vmem:[#allocation2] sm:$0x1]
    %v79 = vlaneseq
    %v80 = vshrl.u32 %v79, 7
    %v81 = vsub.s32 0, %v80
    %v82 = vrot.slane %v77, %v81
    %vm84 = vcmask 72704
    %v86 = vsel %vm84, %v26, 0
    %v89 = vsel %vm84, %v27, 0
    %v92 = vsel %vm84, %v28, 0
    %v95 = vsel %vm84, %v29, 0
    %v98 = vsel %vm84, %v30, 0
    %v101 = vsel %vm84, %v31, 0
    %v104 = vsel %vm84, %v32, 0
    %v107 = vsel %vm84, %v33, 0
    %v110 = vsel %vm84, %v34, 0
    %v113 = vsel %vm84, %v35, 0
    %v116 = vsel %vm84, %v36, 0
    %v119 = vsel %vm84, %v37, 0
    %v122 = vsel %vm84, %v38, 0
    %v125 = vsel %vm84, %v39, 0
    %v128 = vsel %vm84, %v40, 0
    %v131 = vsel %vm84, %v41, 0
    %v134 = vsel %vm84, %v42, 0
    %v137 = vsel %vm84, %v43, 0
    %v140 = vsel %vm84, %v44, 0
    %v143 = vsel %vm84, %v45, 0
    %v146 = vsel %vm84, %v46, 0
    %v149 = vsel %vm84, %v47, 0
    %v152 = vsel %vm84, %v48, 0
    %v155 = vsel %vm84, %v49, 0
    %v158 = vsel %vm84, %v50, 0
    %v161 = vsel %vm84, %v51, 0
    %v164 = vsel %vm84, %v52, 0
    %v167 = vsel %vm84, %v53, 0
    %v170 = vsel %vm84, %v54, 0
    %v173 = vsel %vm84, %v55, 0
    %v176 = vsel %vm84, %v56, 0
    %v179 = vsel %vm84, %v57, 0
    %v182 = vsel %vm84, %v58, 0
    %v185 = vsel %vm84, %v59, 0
    %v188 = vsel %vm84, %v60, 0
    %v191 = vsel %vm84, %v61, 0
    %v194 = vsel %vm84, %v62, 0
    %v197 = vsel %vm84, %v63, 0
    %v200 = vsel %vm84, %v64, 0
    %v203 = vsel %vm84, %v65, 0
    %v206 = vsel %vm84, %v66, 0
    %v209 = vsel %vm84, %v67, 0
    %v212 = vsel %vm84, %v68, 0
    %v215 = vsel %vm84, %v69, 0
    %v218 = vsel %vm84, %v70, 0
    %v221 = vsel %vm84, %v71, 0
    %v224 = vsel %vm84, %v72, 0
    %v227 = vsel %vm84, %v73, 0
    %v230 = vsel %vm84, %v74, 0
    %vm232 = vcmask 1040384
    %v234 = vsel %vm232, %v76, 0
    %236 = vmatprep.subr.mxu0 0.0
    %237 = vmatpush1.msra.mxu0 0.0
    %238 = vmatprep.subr.mxu0 0.0
    %239 = vmatpush1.msra.mxu0 0.0
    %240 = vmatprep.subr.mxu0 0.0
    %241 = vmatpush1.msra.mxu0 0.0
    %242 = vmatprep.subr.mxu0 0.0
    %243 = vmatpush1.msra.mxu0 0.0
    %244 = vmatprep.subr.mxu0 0.0
    %245 = vmatpush1.msra.mxu0 0.0
    %246 = vmatprep.subr.mxu0 0.0
    %247 = vmatpush1.msra.mxu0 0.0
    %248 = vmatprep.subr.mxu0 0.0
    %249 = vmatpush1.msra.mxu0 0.0
    %250 = vmatprep.subr.mxu0 0.0
    %251 = vmatpush1.msra.mxu0 0.0
    %252 = vmatprep.subr.mxu0 0.0
    %253 = vmatpush1.msra.mxu0 0.0
    %254 = vmatprep.subr.mxu0 0.0
    %255 = vmatpush1.msra.mxu0 0.0
    %256 = vmatprep.subr.mxu0 0.0
    %257 = vmatpush1.msra.mxu0 0.0
    %258 = vmatprep.subr.mxu0 0.0
    %259 = vmatpush1.msra.mxu0 0.0
    %260 = vmatprep.subr.mxu0 0.0
    %261 = vmatpush1.msra.mxu0 0.0
    %262 = vmatprep.subr.mxu0 0.0
    %263 = vmatpush1.msra.mxu0 0.0
    %264 = vmatprep.subr.mxu0 0.0
    %265 = vmatpush1.msra.mxu0 %v234
    %266 = vmatprep.subr.mxu0 0.0
    %267 = vmatpush1.msra.mxu0 %v75
    %268 = vmatprep.subr.mxu0 0.0
    %269 = vmatpush2.msra.mxu0 0.0
    %270 = vmatprep.subr.mxu0 0.0
    %271 = vmatpush2.msra.mxu0 0.0
    %272 = vmatprep.subr.mxu0 0.0
    %273 = vmatpush2.msra.mxu0 0.0
    %274 = vmatprep.subr.mxu0 0.0
    %275 = vmatpush2.msra.mxu0 0.0
    %276 = vmatprep.subr.mxu0 0.0
    %277 = vmatpush2.msra.mxu0 0.0
    %278 = vmatprep.subr.mxu0 0.0
    %279 = vmatpush2.msra.mxu0 0.0
    %280 = vmatprep.subr.mxu0 0.0
    %281 = vmatpush2.msra.mxu0 0.0
    %282 = vmatprep.subr.mxu0 0.0
    %283 = vmatpush2.msra.mxu0 0.0
    %284 = vmatprep.subr.mxu0 0.0
    %285 = vmatpush2.msra.mxu0 0.0
    %286 = vmatprep.subr.mxu0 0.0
    %287 = vmatpush2.msra.mxu0 0.0
    %288 = vmatprep.subr.mxu0 0.0
    %289 = vmatpush2.msra.mxu0 0.0
    %290 = vmatprep.subr.mxu0 0.0
    %291 = vmatpush2.msra.mxu0 0.0
    %292 = vmatprep.subr.mxu0 0.0
    %293 = vmatpush2.msra.mxu0 0.0
    %294 = vmatprep.subr.mxu0 0.0
    %295 = vmatpush2.msra.mxu0 0.0
    %296 = vmatprep.subr.mxu0 0.0
    %297 = vmatpush2.msra.mxu0 0.0
    %298 = vmatprep.subr.mxu0 0.0
    %299 = vmatpush2.msra.mxu0 0.0
    %300 = vmatprep.mubr.f32.mxu0 0.0
    %301 = vmatmul.mubr.f32.gmra.mxu0 %v86
    %v302 = vpop.f32.mrf.mxu0
    %v303 = vadd.f32 %v82, %v302
    %v304 = vpop.f32.mrf.mxu0
    %305 = vmatprep.mubr.f32.mxu0 0.0
    %306 = vmatmul.mubr.f32.gmra.mxu0 %v89
    %v307 = vpop.f32.mrf.mxu0
    %v308 = vadd.f32 %v82, %v307
    %v309 = vpop.f32.mrf.mxu0
    %310 = vmatprep.mubr.f32.mxu0 0.0
    %311 = vmatmul.mubr.f32.gmra.mxu0 %v92
    %v312 = vpop.f32.mrf.mxu0
    %v313 = vadd.f32 %v82, %v312
    %v314 = vpop.f32.mrf.mxu0
    %315 = vmatprep.mubr.f32.mxu0 0.0
    %316 = vmatmul.mubr.f32.gmra.mxu0 %v95
    %v317 = vpop.f32.mrf.mxu0
    %v318 = vadd.f32 %v82, %v317
    %v319 = vpop.f32.mrf.mxu0
    %320 = vmatprep.mubr.f32.mxu0 0.0
    %321 = vmatmul.mubr.f32.gmra.mxu0 %v98
    %v322 = vpop.f32.mrf.mxu0
    %v323 = vadd.f32 %v82, %v322
    %v324 = vpop.f32.mrf.mxu0
    %325 = vmatprep.mubr.f32.mxu0 0.0
    %326 = vmatmul.mubr.f32.gmra.mxu0 %v101
    %v327 = vpop.f32.mrf.mxu0
    %v328 = vadd.f32 %v82, %v327
    %v329 = vpop.f32.mrf.mxu0
    %330 = vmatprep.mubr.f32.mxu0 0.0
    %331 = vmatmul.mubr.f32.gmra.mxu0 %v104
    %v332 = vpop.f32.mrf.mxu0
    %v333 = vadd.f32 %v82, %v332
    %v334 = vpop.f32.mrf.mxu0
    %335 = vmatprep.mubr.f32.mxu0 0.0
    %336 = vmatmul.mubr.f32.gmra.mxu0 %v107
    %v337 = vpop.f32.mrf.mxu0
    %v338 = vadd.f32 %v82, %v337
    %v339 = vpop.f32.mrf.mxu0
    %340 = vmatprep.mubr.f32.mxu0 0.0
    %341 = vmatmul.mubr.f32.gmra.mxu0 %v110
    %v342 = vpop.f32.mrf.mxu0
    %v343 = vadd.f32 %v82, %v342
    %v344 = vpop.f32.mrf.mxu0
    %345 = vmatprep.mubr.f32.mxu0 0.0
    %346 = vmatmul.mubr.f32.gmra.mxu0 %v113
    %v347 = vpop.f32.mrf.mxu0
    %v348 = vadd.f32 %v82, %v347
    %v349 = vpop.f32.mrf.mxu0
    %350 = vmatprep.mubr.f32.mxu0 0.0
    %351 = vmatmul.mubr.f32.gmra.mxu0 %v116
    %v352 = vpop.f32.mrf.mxu0
    %v353 = vadd.f32 %v82, %v352
    %v354 = vpop.f32.mrf.mxu0
    %355 = vmatprep.mubr.f32.mxu0 0.0
    %356 = vmatmul.mubr.f32.gmra.mxu0 %v119
    %v357 = vpop.f32.mrf.mxu0
    %v358 = vadd.f32 %v82, %v357
    %v359 = vpop.f32.mrf.mxu0
    %360 = vmatprep.mubr.f32.mxu0 0.0
    %361 = vmatmul.mubr.f32.gmra.mxu0 %v122
    %v362 = vpop.f32.mrf.mxu0
    %v363 = vadd.f32 %v82, %v362
    %v364 = vpop.f32.mrf.mxu0
    %365 = vmatprep.mubr.f32.mxu0 0.0
    %366 = vmatmul.mubr.f32.gmra.mxu0 %v125
    %v367 = vpop.f32.mrf.mxu0
    %v368 = vadd.f32 %v82, %v367
    %v369 = vpop.f32.mrf.mxu0
    %370 = vmatprep.mubr.f32.mxu0 0.0
    %371 = vmatmul.mubr.f32.gmra.mxu0 %v128
    %v372 = vpop.f32.mrf.mxu0
    %v373 = vadd.f32 %v82, %v372
    %v374 = vpop.f32.mrf.mxu0
    %375 = vmatprep.mubr.f32.mxu0 0.0
    %376 = vmatmul.mubr.f32.gmra.mxu0 %v131
    %v377 = vpop.f32.mrf.mxu0
    %v378 = vadd.f32 %v82, %v377
    %v379 = vpop.f32.mrf.mxu0
    %380 = vmatprep.mubr.f32.mxu0 0.0
    %381 = vmatmul.mubr.f32.gmra.mxu0 %v134
    %v382 = vpop.f32.mrf.mxu0
    %v383 = vadd.f32 %v82, %v382
    %v384 = vpop.f32.mrf.mxu0
    %385 = vmatprep.mubr.f32.mxu0 0.0
    %386 = vmatmul.mubr.f32.gmra.mxu0 %v137
    %v387 = vpop.f32.mrf.mxu0
    %v388 = vadd.f32 %v82, %v387
    %v389 = vpop.f32.mrf.mxu0
    %390 = vmatprep.mubr.f32.mxu0 0.0
    %391 = vmatmul.mubr.f32.gmra.mxu0 %v140
    %v392 = vpop.f32.mrf.mxu0
    %v393 = vadd.f32 %v82, %v392
    %v394 = vpop.f32.mrf.mxu0
    %395 = vmatprep.mubr.f32.mxu0 0.0
    %396 = vmatmul.mubr.f32.gmra.mxu0 %v143
    %v397 = vpop.f32.mrf.mxu0
    %v398 = vadd.f32 %v82, %v397
    %v399 = vpop.f32.mrf.mxu0
    %400 = vmatprep.mubr.f32.mxu0 0.0
    %401 = vmatmul.mubr.f32.gmra.mxu0 %v146
    %v402 = vpop.f32.mrf.mxu0
    %v403 = vadd.f32 %v82, %v402
    %v404 = vpop.f32.mrf.mxu0
    %405 = vmatprep.mubr.f32.mxu0 0.0
    %406 = vmatmul.mubr.f32.gmra.mxu0 %v149
    %v407 = vpop.f32.mrf.mxu0
    %v408 = vadd.f32 %v82, %v407
    %v409 = vpop.f32.mrf.mxu0
    %410 = vmatprep.mubr.f32.mxu0 0.0
    %411 = vmatmul.mubr.f32.gmra.mxu0 %v152
    %v412 = vpop.f32.mrf.mxu0
    %v413 = vadd.f32 %v82, %v412
    %v414 = vpop.f32.mrf.mxu0
    %415 = vmatprep.mubr.f32.mxu0 0.0
    %416 = vmatmul.mubr.f32.gmra.mxu0 %v155
    %v417 = vpop.f32.mrf.mxu0
    %v418 = vadd.f32 %v82, %v417
    %v419 = vpop.f32.mrf.mxu0
    %420 = vmatprep.mubr.f32.mxu0 0.0
    %421 = vmatmul.mubr.f32.gmra.mxu0 %v158
    %v422 = vpop.f32.mrf.mxu0
    %v423 = vadd.f32 %v82, %v422
    %v424 = vpop.f32.mrf.mxu0
    %425 = vmatprep.mubr.f32.mxu0 0.0
    %426 = vmatmul.mubr.f32.gmra.mxu0 %v161
    %v427 = vpop.f32.mrf.mxu0
    %v428 = vadd.f32 %v82, %v427
    %v429 = vpop.f32.mrf.mxu0
    %430 = vmatprep.mubr.f32.mxu0 0.0
    %431 = vmatmul.mubr.f32.gmra.mxu0 %v164
    %v432 = vpop.f32.mrf.mxu0
    %v433 = vadd.f32 %v82, %v432
    %v434 = vpop.f32.mrf.mxu0
    %435 = vmatprep.mubr.f32.mxu0 0.0
    %436 = vmatmul.mubr.f32.gmra.mxu0 %v167
    %v437 = vpop.f32.mrf.mxu0
    %v438 = vadd.f32 %v82, %v437
    %v439 = vpop.f32.mrf.mxu0
    %440 = vmatprep.mubr.f32.mxu0 0.0
    %441 = vmatmul.mubr.f32.gmra.mxu0 %v170
    %v442 = vpop.f32.mrf.mxu0
    %v443 = vadd.f32 %v82, %v442
    %v444 = vpop.f32.mrf.mxu0
    %445 = vmatprep.mubr.f32.mxu0 0.0
    %446 = vmatmul.mubr.f32.gmra.mxu0 %v173
    %v447 = vpop.f32.mrf.mxu0
    %v448 = vadd.f32 %v82, %v447
    %v449 = vpop.f32.mrf.mxu0
    %450 = vmatprep.mubr.f32.mxu0 0.0
    %451 = vmatmul.mubr.f32.gmra.mxu0 %v176
    %v452 = vpop.f32.mrf.mxu0
    %v453 = vadd.f32 %v82, %v452
    %v454 = vpop.f32.mrf.mxu0
    %455 = vmatprep.mubr.f32.mxu0 0.0
    %456 = vmatmul.mubr.f32.gmra.mxu0 %v179
    %v457 = vpop.f32.mrf.mxu0
    %v458 = vadd.f32 %v82, %v457
    %v459 = vpop.f32.mrf.mxu0
    %460 = vmatprep.mubr.f32.mxu0 0.0
    %461 = vmatmul.mubr.f32.gmra.mxu0 %v182
    %v462 = vpop.f32.mrf.mxu0
    %v463 = vadd.f32 %v82, %v462
    %v464 = vpop.f32.mrf.mxu0
    %465 = vmatprep.mubr.f32.mxu0 0.0
    %466 = vmatmul.mubr.f32.gmra.mxu0 %v185
    %v467 = vpop.f32.mrf.mxu0
    %v468 = vadd.f32 %v82, %v467
    %v469 = vpop.f32.mrf.mxu0
    %470 = vmatprep.mubr.f32.mxu0 0.0
    %471 = vmatmul.mubr.f32.gmra.mxu0 %v188
    %v472 = vpop.f32.mrf.mxu0
    %v473 = vadd.f32 %v82, %v472
    %v474 = vpop.f32.mrf.mxu0
    %475 = vmatprep.mubr.f32.mxu0 0.0
    %476 = vmatmul.mubr.f32.gmra.mxu0 %v191
    %v477 = vpop.f32.mrf.mxu0
    %v478 = vadd.f32 %v82, %v477
    %v479 = vpop.f32.mrf.mxu0
    %480 = vmatprep.mubr.f32.mxu0 0.0
    %481 = vmatmul.mubr.f32.gmra.mxu0 %v194
    %v482 = vpop.f32.mrf.mxu0
    %v483 = vadd.f32 %v82, %v482
    %v484 = vpop.f32.mrf.mxu0
    %485 = vmatprep.mubr.f32.mxu0 0.0
    %486 = vmatmul.mubr.f32.gmra.mxu0 %v197
    %v487 = vpop.f32.mrf.mxu0
    %v488 = vadd.f32 %v82, %v487
    %v489 = vpop.f32.mrf.mxu0
    %490 = vmatprep.mubr.f32.mxu0 0.0
    %491 = vmatmul.mubr.f32.gmra.mxu0 %v200
    %v492 = vpop.f32.mrf.mxu0
    %v493 = vadd.f32 %v82, %v492
    %v494 = vpop.f32.mrf.mxu0
    %495 = vmatprep.mubr.f32.mxu0 0.0
    %496 = vmatmul.mubr.f32.gmra.mxu0 %v203
    %v497 = vpop.f32.mrf.mxu0
    %v498 = vadd.f32 %v82, %v497
    %v499 = vpop.f32.mrf.mxu0
    %500 = vmatprep.mubr.f32.mxu0 0.0
    %501 = vmatmul.mubr.f32.gmra.mxu0 %v206
    %v502 = vpop.f32.mrf.mxu0
    %v503 = vadd.f32 %v82, %v502
    %v504 = vpop.f32.mrf.mxu0
    %505 = vmatprep.mubr.f32.mxu0 0.0
    %506 = vmatmul.mubr.f32.gmra.mxu0 %v209
    %v507 = vpop.f32.mrf.mxu0
    %v508 = vadd.f32 %v82, %v507
    %v509 = vpop.f32.mrf.mxu0
    %510 = vmatprep.mubr.f32.mxu0 0.0
    %511 = vmatmul.mubr.f32.gmra.mxu0 %v212
    %v512 = vpop.f32.mrf.mxu0
    %v513 = vadd.f32 %v82, %v512
    %v514 = vpop.f32.mrf.mxu0
    %515 = vmatprep.mubr.f32.mxu0 0.0
    %516 = vmatmul.mubr.f32.gmra.mxu0 %v215
    %v517 = vpop.f32.mrf.mxu0
    %v518 = vadd.f32 %v82, %v517
    %v519 = vpop.f32.mrf.mxu0
    %520 = vmatprep.mubr.f32.mxu0 0.0
    %521 = vmatmul.mubr.f32.gmra.mxu0 %v218
    %v522 = vpop.f32.mrf.mxu0
    %v523 = vadd.f32 %v82, %v522
    %v524 = vpop.f32.mrf.mxu0
    %525 = vmatprep.mubr.f32.mxu0 0.0
    %526 = vmatmul.mubr.f32.gmra.mxu0 %v221
    %v527 = vpop.f32.mrf.mxu0
    %v528 = vadd.f32 %v82, %v527
    %v529 = vpop.f32.mrf.mxu0
    %530 = vmatprep.mubr.f32.mxu0 0.0
    %531 = vmatmul.mubr.f32.gmra.mxu0 %v224
    %v532 = vpop.f32.mrf.mxu0
    %v533 = vadd.f32 %v82, %v532
    %v534 = vpop.f32.mrf.mxu0
    %535 = vmatprep.mubr.f32.mxu0 0.0
    %536 = vmatmul.mubr.f32.gmra.mxu0 %v227
    %v537 = vpop.f32.mrf.mxu0
    %v538 = vadd.f32 %v82, %v537
    %v539 = vpop.f32.mrf.mxu0
    %540 = vmatprep.mubr.f32.mxu0 0.0
    %541 = vmatmul.mubr.f32.gmra.mxu0 %v230
    %v542 = vpop.f32.mrf.mxu0
    %v543 = vadd.f32 %v82, %v542
    %v544 = vpop.f32.mrf.mxu0
    %545 = vdwg.mxu0
    %v546 = vmax.f32 %v303, 0.0
    %v547 = vmax.f32 %v308, 0.0
    %v548 = vmax.f32 %v313, 0.0
    %v549 = vmax.f32 %v318, 0.0
    %v550 = vmax.f32 %v323, 0.0
    %v551 = vmax.f32 %v328, 0.0
    %v552 = vmax.f32 %v333, 0.0
    %v553 = vmax.f32 %v338, 0.0
    %v554 = vmax.f32 %v343, 0.0
    %v555 = vmax.f32 %v348, 0.0
    %v556 = vmax.f32 %v353, 0.0
    %v557 = vmax.f32 %v358, 0.0
    %v558 = vmax.f32 %v363, 0.0
    %v559 = vmax.f32 %v368, 0.0
    %v560 = vmax.f32 %v373, 0.0
    %v561 = vmax.f32 %v378, 0.0
    %v562 = vmax.f32 %v383, 0.0
    %v563 = vmax.f32 %v388, 0.0
    %v564 = vmax.f32 %v393, 0.0
    %v565 = vmax.f32 %v398, 0.0
    %v566 = vmax.f32 %v403, 0.0
    %v567 = vmax.f32 %v408, 0.0
    %v568 = vmax.f32 %v413, 0.0
    %v569 = vmax.f32 %v418, 0.0
    %v570 = vmax.f32 %v423, 0.0
    %v571 = vmax.f32 %v428, 0.0
    %v572 = vmax.f32 %v433, 0.0
    %v573 = vmax.f32 %v438, 0.0
    %v574 = vmax.f32 %v443, 0.0
    %v575 = vmax.f32 %v448, 0.0
    %v576 = vmax.f32 %v453, 0.0
    %v577 = vmax.f32 %v458, 0.0
    %v578 = vmax.f32 %v463, 0.0
    %v579 = vmax.f32 %v468, 0.0
    %v580 = vmax.f32 %v473, 0.0
    %v581 = vmax.f32 %v478, 0.0
    %v582 = vmax.f32 %v483, 0.0
    %v583 = vmax.f32 %v488, 0.0
    %v584 = vmax.f32 %v493, 0.0
    %v585 = vmax.f32 %v498, 0.0
    %v586 = vmax.f32 %v503, 0.0
    %v587 = vmax.f32 %v508, 0.0
    %v588 = vmax.f32 %v513, 0.0
    %v589 = vmax.f32 %v518, 0.0
    %v590 = vmax.f32 %v523, 0.0
    %v591 = vmax.f32 %v528, 0.0
    %v592 = vmax.f32 %v533, 0.0
    %v593 = vmax.f32 %v538, 0.0
    %v594 = vmax.f32 %v543, 0.0
    %vm595 = vcmask 130048
    %596 = vst.msk [vmem:[%s3] sm:$0xff] %vm595, %v546
    %597 = vst.msk [vmem:[%s3 + $0x8] sm:$0xff] %vm595, %v547
    %598 = vst.msk [vmem:[%s3 + $0x10] sm:$0xff] %vm595, %v548
    %599 = vst.msk [vmem:[%s3 + $0x18] sm:$0xff] %vm595, %v549
    %600 = vst.msk [vmem:[%s3 + $0x20] sm:$0xff] %vm595, %v550
    %601 = vst.msk [vmem:[%s3 + $0x28] sm:$0xff] %vm595, %v551
    %602 = vst.msk [vmem:[%s3 + $0x30] sm:$0xff] %vm595, %v552
    %603 = vst.msk [vmem:[%s3 + $0x38] sm:$0xff] %vm595, %v553
    %604 = vst.msk [vmem:[%s3 + $0x40] sm:$0xff] %vm595, %v554
    %605 = vst.msk [vmem:[%s3 + $0x48] sm:$0xff] %vm595, %v555
    %606 = vst.msk [vmem:[%s3 + $0x50] sm:$0xff] %vm595, %v556
    %607 = vst.msk [vmem:[%s3 + $0x58] sm:$0xff] %vm595, %v557
    %608 = vst.msk [vmem:[%s3 + $0x60] sm:$0xff] %vm595, %v558
    %609 = vst.msk [vmem:[%s3 + $0x68] sm:$0xff] %vm595, %v559
    %610 = vst.msk [vmem:[%s3 + $0x70] sm:$0xff] %vm595, %v560
    %611 = vst.msk [vmem:[%s3 + $0x78] sm:$0xff] %vm595, %v561
    %612 = vst.msk [vmem:[%s3 + $0x80] sm:$0xff] %vm595, %v562
    %613 = vst.msk [vmem:[%s3 + $0x88] sm:$0xff] %vm595, %v563
    %614 = vst.msk [vmem:[%s3 + $0x90] sm:$0xff] %vm595, %v564
    %615 = vst.msk [vmem:[%s3 + $0x98] sm:$0xff] %vm595, %v565
    %616 = vst.msk [vmem:[%s3 + $0xa0] sm:$0xff] %vm595, %v566
    %617 = vst.msk [vmem:[%s3 + $0xa8] sm:$0xff] %vm595, %v567
    %618 = vst.msk [vmem:[%s3 + $0xb0] sm:$0xff] %vm595, %v568
    %619 = vst.msk [vmem:[%s3 + $0xb8] sm:$0xff] %vm595, %v569
    %620 = vst.msk [vmem:[%s3 + $0xc0] sm:$0xff] %vm595, %v570
    %621 = vst.msk [vmem:[%s3 + $0xc8] sm:$0xff] %vm595, %v571
    %622 = vst.msk [vmem:[%s3 + $0xd0] sm:$0xff] %vm595, %v572
    %623 = vst.msk [vmem:[%s3 + $0xd8] sm:$0xff] %vm595, %v573
    %624 = vst.msk [vmem:[%s3 + $0xe0] sm:$0xff] %vm595, %v574
    %625 = vst.msk [vmem:[%s3 + $0xe8] sm:$0xff] %vm595, %v575
    %626 = vst.msk [vmem:[%s3 + $0xf0] sm:$0xff] %vm595, %v576
    %627 = vst.msk [vmem:[%s3 + $0xf8] sm:$0xff] %vm595, %v577
    %628 = vst.msk [vmem:[%s3 + $0x100] sm:$0xff] %vm595, %v578
    %629 = vst.msk [vmem:[%s3 + $0x108] sm:$0xff] %vm595, %v579
    %630 = vst.msk [vmem:[%s3 + $0x110] sm:$0xff] %vm595, %v580
    %631 = vst.msk [vmem:[%s3 + $0x118] sm:$0xff] %vm595, %v581
    %632 = vst.msk [vmem:[%s3 + $0x120] sm:$0xff] %vm595, %v582
    %633 = vst.msk [vmem:[%s3 + $0x128] sm:$0xff] %vm595, %v583
    %634 = vst.msk [vmem:[%s3 + $0x130] sm:$0xff] %vm595, %v584
    %635 = vst.msk [vmem:[%s3 + $0x138] sm:$0xff] %vm595, %v585
    %636 = vst.msk [vmem:[%s3 + $0x140] sm:$0xff] %vm595, %v586
    %637 = vst.msk [vmem:[%s3 + $0x148] sm:$0xff] %vm595, %v587
    %638 = vst.msk [vmem:[%s3 + $0x150] sm:$0xff] %vm595, %v588
    %639 = vst.msk [vmem:[%s3 + $0x158] sm:$0xff] %vm595, %v589
    %640 = vst.msk [vmem:[%s3 + $0x160] sm:$0xff] %vm595, %v590
    %641 = vst.msk [vmem:[%s3 + $0x168] sm:$0xff] %vm595, %v591
    %642 = vst.msk [vmem:[%s3 + $0x170] sm:$0xff] %vm595, %v592
    %643 = vst.msk [vmem:[%s3 + $0x178] sm:$0xff] %vm595, %v593
    %644 = vst.msk [vmem:[%s3 + $0x180] sm:$0xff] %vm595, %v594
    // Predicated region
    $region18: #{net1_forward.3} parent=1 // pred_check
      _
    $region19: #{net1_forward.3} parent=1 // pred_check_branch
      %646 = sbr.rel (0) target = $region21
    $region20: #{net1_forward.3} parent=1 // pred_region
      _
    $region21: #{net1_forward.3} parent=1 // pred_fallthru
      _
    // Predicated region
    $region22: #{net1_forward.3} parent=1 // pred_check
      _
    $region23: #{net1_forward.3} parent=1 // pred_check_branch
      %648 = sbr.rel (0) target = $region25
    $region24: #{net1_forward.3} parent=1 // pred_region
      _
    $region25: #{net1_forward.3} parent=1 // pred_fallthru
      _
    %649 = vsyncpa [#allocation3], 1

// kernel: net1_forward.4
$region0: #{net1_forward.4}
  #allocation0 [shape = 'u32[]', space=smem, size = 0x4, offset = 0x4, fixed_abs, tag = 'smem constant byte address 0x4 - core index']
  #allocation1 [shape = 'u32[144,128]{1,0:T(1,128)}', space=vmem, size = 0x12000, scoped, tag = 'internal scratch']
  %s0 = inlined_call_operand.vmem [shape: f32[4,80,144], index: 0, kind: input, shape index: {}]
  %s1 = inlined_call_operand.vmem [shape: f32[144,32], index: 1, kind: input, shape index: {}]
  %s2 = inlined_call_operand.vmem [shape: f32[1,32], index: 2, kind: input, shape index: {}]
  %s3 = inlined_call_operand.vmem [shape: f32[80,32], index: 3, kind: output, shape index: {}]
  %s4 = sld [smem:[#allocation0]]
  $region22: #{net1_forward.4} parent=0
    _
  %s6 = ssub.s32 1, %s4
  %s7 = scalar_select 0, %s6, %s4
  // Predicated region
  $region2: #{net1_forward.4} parent=0 // pred_check
    _
  $region3: #{net1_forward.4} parent=0 // pred_check_branch
    %9 = sbr.rel (0) target = $region5
  $region4: #{net1_forward.4} parent=0 // pred_region
    _
  $region5: #{net1_forward.4} parent=0 // pred_fallthru
    _
  // Predicated region
  $region6: #{net1_forward.4} parent=0 // pred_check
    _
  $region7: #{net1_forward.4} parent=0 // pred_check_branch
    %11 = sbr.rel (0) target = $region9
  $region8: #{net1_forward.4} parent=0 // pred_region
    _
  $region9: #{net1_forward.4} parent=0 // pred_fallthru
    _
  // Predicated region
  $region10: #{net1_forward.4} parent=0 // pred_check
    _
  $region11: #{net1_forward.4} parent=0 // pred_check_branch
    %13 = sbr.rel (0) target = $region13
  $region12: #{net1_forward.4} parent=0 // pred_region
    _
  $region13: #{net1_forward.4} parent=0 // pred_fallthru
    _
  %v14 = vld [vmem:[%s1] sm:$0xff]
  %v15 = vld [vmem:[%s1 + $0x8] sm:$0xff]
  %v16 = vld [vmem:[%s1 + $0x10] sm:$0xff]
  %v17 = vld [vmem:[%s1 + $0x18] sm:$0xff]
  %v18 = vld [vmem:[%s1 + $0x20] sm:$0xff]
  %v19 = vld [vmem:[%s1 + $0x28] sm:$0xff]
  %v20 = vld [vmem:[%s1 + $0x30] sm:$0xff]
  %v21 = vld [vmem:[%s1 + $0x38] sm:$0xff]
  %v22 = vld [vmem:[%s1 + $0x40] sm:$0xff]
  %v23 = vld [vmem:[%s1 + $0x48] sm:$0xff]
  %v24 = vld [vmem:[%s1 + $0x50] sm:$0xff]
  %v25 = vld [vmem:[%s1 + $0x58] sm:$0xff]
  %v26 = vld [vmem:[%s1 + $0x60] sm:$0xff]
  %v27 = vld [vmem:[%s1 + $0x68] sm:$0xff]
  %v28 = vld [vmem:[%s1 + $0x70] sm:$0xff]
  %v29 = vld [vmem:[%s1 + $0x78] sm:$0xff]
  %v30 = vld [vmem:[%s1 + $0x80] sm:$0xff]
  %v31 = vld [vmem:[%s1 + $0x88] sm:$0xff]
  %v32 = vld [vmem:[%s0] sm:$0xff]
  %v33 = vld [vmem:[%s0 + $0x8] sm:$0xff]
  %v34 = vld [vmem:[%s0 + $0x10] sm:$0xff]
  %v35 = vld [vmem:[%s0 + $0x18] sm:$0xff]
  %v36 = vld [vmem:[%s0 + $0x20] sm:$0xff]
  %v37 = vld [vmem:[%s0 + $0x28] sm:$0xff]
  %v38 = vld [vmem:[%s0 + $0x30] sm:$0xff]
  %v39 = vld [vmem:[%s0 + $0x38] sm:$0xff]
  %v40 = vld [vmem:[%s0 + $0x40] sm:$0xff]
  %v41 = vld [vmem:[%s0 + $0x48] sm:$0xff]
  %v42 = vld [vmem:[%s0 + $0x50] sm:$0xff]
  %v43 = vld [vmem:[%s0 + $0x58] sm:$0xff]
  %v44 = vld [vmem:[%s0 + $0x60] sm:$0xff]
  %v45 = vld [vmem:[%s0 + $0x68] sm:$0xff]
  %v46 = vld [vmem:[%s0 + $0x70] sm:$0xff]
  %v47 = vld [vmem:[%s0 + $0x78] sm:$0xff]
  %v48 = vld [vmem:[%s0 + $0x80] sm:$0xff]
  %v49 = vld [vmem:[%s0 + $0x88] sm:$0xff]
  %v50 = vld [vmem:[%s0 + $0x90] sm:$0xff]
  %v51 = vld [vmem:[%s0 + $0x98] sm:$0xff]
  %vm52 = vcmask 130048
  %v54 = vsel %vm52, %v33, 0
  %v57 = vsel %vm52, %v35, 0
  %v60 = vsel %vm52, %v37, 0
  %v63 = vsel %vm52, %v39, 0
  %v66 = vsel %vm52, %v41, 0
  %v69 = vsel %vm52, %v43, 0
  %v72 = vsel %vm52, %v45, 0
  %v75 = vsel %vm52, %v47, 0
  %v78 = vsel %vm52, %v49, 0
  %v81 = vsel %vm52, %v51, 0
  %83 = vmatprep.subr.mxu0 0.0
  %84 = vmatpush1.msra.mxu0 %v29
  %85 = vmatprep.subr.mxu0 0.0
  %86 = vmatpush1.msra.mxu0 %v28
  %87 = vmatprep.subr.mxu0 0.0
  %88 = vmatpush1.msra.mxu0 %v27
  %89 = vmatprep.subr.mxu0 0.0
  %90 = vmatpush1.msra.mxu0 %v26
  %91 = vmatprep.subr.mxu0 0.0
  %92 = vmatpush1.msra.mxu0 %v25
  %93 = vmatprep.subr.mxu0 0.0
  %94 = vmatpush1.msra.mxu0 %v24
  %95 = vmatprep.subr.mxu0 0.0
  %96 = vmatpush1.msra.mxu0 %v23
  %97 = vmatprep.subr.mxu0 0.0
  %98 = vmatpush1.msra.mxu0 %v22
  %99 = vmatprep.subr.mxu0 0.0
  %100 = vmatpush1.msra.mxu0 %v21
  %101 = vmatprep.subr.mxu0 0.0
  %102 = vmatpush1.msra.mxu0 %v20
  %103 = vmatprep.subr.mxu0 0.0
  %104 = vmatpush1.msra.mxu0 %v19
  %105 = vmatprep.subr.mxu0 0.0
  %106 = vmatpush1.msra.mxu0 %v18
  %107 = vmatprep.subr.mxu0 0.0
  %108 = vmatpush1.msra.mxu0 %v17
  %109 = vmatprep.subr.mxu0 0.0
  %110 = vmatpush1.msra.mxu0 %v16
  %111 = vmatprep.subr.mxu0 0.0
  %112 = vmatpush1.msra.mxu0 %v15
  %113 = vmatprep.subr.mxu0 0.0
  %114 = vmatpush1.msra.mxu0 %v14
  %115 = vmatprep.subr.mxu0 0.0
  %116 = vmatpush2.msra.mxu0 0.0
  %117 = vmatprep.subr.mxu0 0.0
  %118 = vmatpush2.msra.mxu0 0.0
  %119 = vmatprep.subr.mxu0 0.0
  %120 = vmatpush2.msra.mxu0 0.0
  %121 = vmatprep.subr.mxu0 0.0
  %122 = vmatpush2.msra.mxu0 0.0
  %123 = vmatprep.subr.mxu0 0.0
  %124 = vmatpush2.msra.mxu0 0.0
  %125 = vmatprep.subr.mxu0 0.0
  %126 = vmatpush2.msra.mxu0 0.0
  %127 = vmatprep.subr.mxu0 0.0
  %128 = vmatpush2.msra.mxu0 0.0
  %129 = vmatprep.subr.mxu0 0.0
  %130 = vmatpush2.msra.mxu0 0.0
  %131 = vmatprep.subr.mxu0 0.0
  %132 = vmatpush2.msra.mxu0 0.0
  %133 = vmatprep.subr.mxu0 0.0
  %134 = vmatpush2.msra.mxu0 0.0
  %135 = vmatprep.subr.mxu0 0.0
  %136 = vmatpush2.msra.mxu0 0.0
  %137 = vmatprep.subr.mxu0 0.0
  %138 = vmatpush2.msra.mxu0 0.0
  %139 = vmatprep.subr.mxu0 0.0
  %140 = vmatpush2.msra.mxu0 0.0
  %141 = vmatprep.subr.mxu0 0.0
  %142 = vmatpush2.msra.mxu0 0.0
  %143 = vmatprep.subr.mxu0 0.0
  %144 = vmatpush2.msra.mxu0 %v31
  %145 = vmatprep.subr.mxu0 0.0
  %146 = vmatpush2.msra.mxu0 %v30
  %147 = vmatprep.mubr.f32.mxu0 %v54
  %148 = vmatmul.mubr.f32.gmra.mxu0 %v32
  %v149 = vpop.f32.mrf.mxu0
  %v150 = vadd.f32 0.0, %v149
  %v151 = vpop.f32.mrf.mxu0
  %152 = vmatprep.mubr.f32.mxu0 %v57
  %153 = vmatmul.mubr.f32.gmra.mxu0 %v34
  %v154 = vpop.f32.mrf.mxu0
  %v155 = vadd.f32 0.0, %v154
  %v156 = vpop.f32.mrf.mxu0
  %157 = vmatprep.mubr.f32.mxu0 %v60
  %158 = vmatmul.mubr.f32.gmra.mxu0 %v36
  %v159 = vpop.f32.mrf.mxu0
  %v160 = vadd.f32 0.0, %v159
  %v161 = vpop.f32.mrf.mxu0
  %162 = vmatprep.mubr.f32.mxu0 %v63
  %163 = vmatmul.mubr.f32.gmra.mxu0 %v38
  %v164 = vpop.f32.mrf.mxu0
  %v165 = vadd.f32 0.0, %v164
  %v166 = vpop.f32.mrf.mxu0
  %167 = vmatprep.mubr.f32.mxu0 %v66
  %168 = vmatmul.mubr.f32.gmra.mxu0 %v40
  %v169 = vpop.f32.mrf.mxu0
  %v170 = vadd.f32 0.0, %v169
  %v171 = vpop.f32.mrf.mxu0
  %172 = vmatprep.mubr.f32.mxu0 %v69
  %173 = vmatmul.mubr.f32.gmra.mxu0 %v42
  %v174 = vpop.f32.mrf.mxu0
  %v175 = vadd.f32 0.0, %v174
  %v176 = vpop.f32.mrf.mxu0
  %177 = vmatprep.mubr.f32.mxu0 %v72
  %178 = vmatmul.mubr.f32.gmra.mxu0 %v44
  %v179 = vpop.f32.mrf.mxu0
  %v180 = vadd.f32 0.0, %v179
  %v181 = vpop.f32.mrf.mxu0
  %182 = vmatprep.mubr.f32.mxu0 %v75
  %183 = vmatmul.mubr.f32.gmra.mxu0 %v46
  %v184 = vpop.f32.mrf.mxu0
  %v185 = vadd.f32 0.0, %v184
  %v186 = vpop.f32.mrf.mxu0
  %187 = vmatprep.mubr.f32.mxu0 %v78
  %188 = vmatmul.mubr.f32.gmra.mxu0 %v48
  %v189 = vpop.f32.mrf.mxu0
  %v190 = vadd.f32 0.0, %v189
  %v191 = vpop.f32.mrf.mxu0
  %192 = vmatprep.mubr.f32.mxu0 %v81
  %193 = vmatmul.mubr.f32.gmra.mxu0 %v50
  %v194 = vpop.f32.mrf.mxu0
  %v195 = vadd.f32 0.0, %v194
  %v196 = vpop.f32.mrf.mxu0
  %197 = vdwg.mxu0
  %s198 = scalar_lea.vmem %s0, 160
  %v199 = vld [vmem:[%s198] sm:$0xff]
  %v200 = vld [vmem:[%s198 + $0x8] sm:$0xff]
  %v201 = vld [vmem:[%s198 + $0x10] sm:$0xff]
  %v202 = vld [vmem:[%s198 + $0x18] sm:$0xff]
  %v203 = vld [vmem:[%s198 + $0x20] sm:$0xff]
  %v204 = vld [vmem:[%s198 + $0x28] sm:$0xff]
  %v205 = vld [vmem:[%s198 + $0x30] sm:$0xff]
  %v206 = vld [vmem:[%s198 + $0x38] sm:$0xff]
  %v207 = vld [vmem:[%s198 + $0x40] sm:$0xff]
  %v208 = vld [vmem:[%s198 + $0x48] sm:$0xff]
  %v209 = vld [vmem:[%s198 + $0x50] sm:$0xff]
  %v210 = vld [vmem:[%s198 + $0x58] sm:$0xff]
  %v211 = vld [vmem:[%s198 + $0x60] sm:$0xff]
  %v212 = vld [vmem:[%s198 + $0x68] sm:$0xff]
  %v213 = vld [vmem:[%s198 + $0x70] sm:$0xff]
  %v214 = vld [vmem:[%s198 + $0x78] sm:$0xff]
  %v215 = vld [vmem:[%s198 + $0x80] sm:$0xff]
  %v216 = vld [vmem:[%s198 + $0x88] sm:$0xff]
  %v217 = vld [vmem:[%s198 + $0x90] sm:$0xff]
  %v218 = vld [vmem:[%s198 + $0x98] sm:$0xff]
  %v220 = vsel %vm52, %v200, 0
  %v223 = vsel %vm52, %v202, 0
  %v226 = vsel %vm52, %v204, 0
  %v229 = vsel %vm52, %v206, 0
  %v232 = vsel %vm52, %v208, 0
  %v235 = vsel %vm52, %v210, 0
  %v238 = vsel %vm52, %v212, 0
  %v241 = vsel %vm52, %v214, 0
  %v244 = vsel %vm52, %v216, 0
  %v247 = vsel %vm52, %v218, 0
  %249 = vmatprep.subr.mxu0 0.0
  %250 = vmatpush1.msra.mxu0 %v29
  %251 = vmatprep.subr.mxu0 0.0
  %252 = vmatpush1.msra.mxu0 %v28
  %253 = vmatprep.subr.mxu0 0.0
  %254 = vmatpush1.msra.mxu0 %v27
  %255 = vmatprep.subr.mxu0 0.0
  %256 = vmatpush1.msra.mxu0 %v26
  %257 = vmatprep.subr.mxu0 0.0
  %258 = vmatpush1.msra.mxu0 %v25
  %259 = vmatprep.subr.mxu0 0.0
  %260 = vmatpush1.msra.mxu0 %v24
  %261 = vmatprep.subr.mxu0 0.0
  %262 = vmatpush1.msra.mxu0 %v23
  %263 = vmatprep.subr.mxu0 0.0
  %264 = vmatpush1.msra.mxu0 %v22
  %265 = vmatprep.subr.mxu0 0.0
  %266 = vmatpush1.msra.mxu0 %v21
  %267 = vmatprep.subr.mxu0 0.0
  %268 = vmatpush1.msra.mxu0 %v20
  %269 = vmatprep.subr.mxu0 0.0
  %270 = vmatpush1.msra.mxu0 %v19
  %271 = vmatprep.subr.mxu0 0.0
  %272 = vmatpush1.msra.mxu0 %v18
  %273 = vmatprep.subr.mxu0 0.0
  %274 = vmatpush1.msra.mxu0 %v17
  %275 = vmatprep.subr.mxu0 0.0
  %276 = vmatpush1.msra.mxu0 %v16
  %277 = vmatprep.subr.mxu0 0.0
  %278 = vmatpush1.msra.mxu0 %v15
  %279 = vmatprep.subr.mxu0 0.0
  %280 = vmatpush1.msra.mxu0 %v14
  %281 = vmatprep.subr.mxu0 0.0
  %282 = vmatpush2.msra.mxu0 0.0
  %283 = vmatprep.subr.mxu0 0.0
  %284 = vmatpush2.msra.mxu0 0.0
  %285 = vmatprep.subr.mxu0 0.0
  %286 = vmatpush2.msra.mxu0 0.0
  %287 = vmatprep.subr.mxu0 0.0
  %288 = vmatpush2.msra.mxu0 0.0
  %289 = vmatprep.subr.mxu0 0.0
  %290 = vmatpush2.msra.mxu0 0.0
  %291 = vmatprep.subr.mxu0 0.0
  %292 = vmatpush2.msra.mxu0 0.0
  %293 = vmatprep.subr.mxu0 0.0
  %294 = vmatpush2.msra.mxu0 0.0
  %295 = vmatprep.subr.mxu0 0.0
  %296 = vmatpush2.msra.mxu0 0.0
  %297 = vmatprep.subr.mxu0 0.0
  %298 = vmatpush2.msra.mxu0 0.0
  %299 = vmatprep.subr.mxu0 0.0
  %300 = vmatpush2.msra.mxu0 0.0
  %301 = vmatprep.subr.mxu0 0.0
  %302 = vmatpush2.msra.mxu0 0.0
  %303 = vmatprep.subr.mxu0 0.0
  %304 = vmatpush2.msra.mxu0 0.0
  %305 = vmatprep.subr.mxu0 0.0
  %306 = vmatpush2.msra.mxu0 0.0
  %307 = vmatprep.subr.mxu0 0.0
  %308 = vmatpush2.msra.mxu0 0.0
  %309 = vmatprep.subr.mxu0 0.0
  %310 = vmatpush2.msra.mxu0 %v31
  %311 = vmatprep.subr.mxu0 0.0
  %312 = vmatpush2.msra.mxu0 %v30
  %313 = vmatprep.mubr.f32.mxu0 %v220
  %314 = vmatmul.mubr.f32.gmra.mxu0 %v199
  %v315 = vpop.f32.mrf.mxu0
  %v316 = vadd.f32 0.0, %v315
  %v317 = vpop.f32.mrf.mxu0
  %318 = vmatprep.mubr.f32.mxu0 %v223
  %319 = vmatmul.mubr.f32.gmra.mxu0 %v201
  %v320 = vpop.f32.mrf.mxu0
  %v321 = vadd.f32 0.0, %v320
  %v322 = vpop.f32.mrf.mxu0
  %323 = vmatprep.mubr.f32.mxu0 %v226
  %324 = vmatmul.mubr.f32.gmra.mxu0 %v203
  %v325 = vpop.f32.mrf.mxu0
  %v326 = vadd.f32 0.0, %v325
  %v327 = vpop.f32.mrf.mxu0
  %328 = vmatprep.mubr.f32.mxu0 %v229
  %329 = vmatmul.mubr.f32.gmra.mxu0 %v205
  %v330 = vpop.f32.mrf.mxu0
  %v331 = vadd.f32 0.0, %v330
  %v332 = vpop.f32.mrf.mxu0
  %333 = vmatprep.mubr.f32.mxu0 %v232
  %334 = vmatmul.mubr.f32.gmra.mxu0 %v207
  %v335 = vpop.f32.mrf.mxu0
  %v336 = vadd.f32 0.0, %v335
  %v337 = vpop.f32.mrf.mxu0
  %338 = vmatprep.mubr.f32.mxu0 %v235
  %339 = vmatmul.mubr.f32.gmra.mxu0 %v209
  %v340 = vpop.f32.mrf.mxu0
  %v341 = vadd.f32 0.0, %v340
  %v342 = vpop.f32.mrf.mxu0
  %343 = vmatprep.mubr.f32.mxu0 %v238
  %344 = vmatmul.mubr.f32.gmra.mxu0 %v211
  %v345 = vpop.f32.mrf.mxu0
  %v346 = vadd.f32 0.0, %v345
  %v347 = vpop.f32.mrf.mxu0
  %348 = vmatprep.mubr.f32.mxu0 %v241
  %349 = vmatmul.mubr.f32.gmra.mxu0 %v213
  %v350 = vpop.f32.mrf.mxu0
  %v351 = vadd.f32 0.0, %v350
  %v352 = vpop.f32.mrf.mxu0
  %353 = vmatprep.mubr.f32.mxu0 %v244
  %354 = vmatmul.mubr.f32.gmra.mxu0 %v215
  %v355 = vpop.f32.mrf.mxu0
  %v356 = vadd.f32 0.0, %v355
  %v357 = vpop.f32.mrf.mxu0
  %358 = vmatprep.mubr.f32.mxu0 %v247
  %359 = vmatmul.mubr.f32.gmra.mxu0 %v217
  %v360 = vpop.f32.mrf.mxu0
  %v361 = vadd.f32 0.0, %v360
  %v362 = vpop.f32.mrf.mxu0
  %363 = vdwg.mxu0
  %s364 = scalar_lea.vmem %s0, 320
  %v365 = vld [vmem:[%s364] sm:$0xff]
  %v366 = vld [vmem:[%s364 + $0x8] sm:$0xff]
  %v367 = vld [vmem:[%s364 + $0x10] sm:$0xff]
  %v368 = vld [vmem:[%s364 + $0x18] sm:$0xff]
  %v369 = vld [vmem:[%s364 + $0x20] sm:$0xff]
  %v370 = vld [vmem:[%s364 + $0x28] sm:$0xff]
  %v371 = vld [vmem:[%s364 + $0x30] sm:$0xff]
  %v372 = vld [vmem:[%s364 + $0x38] sm:$0xff]
  %v373 = vld [vmem:[%s364 + $0x40] sm:$0xff]
  %v374 = vld [vmem:[%s364 + $0x48] sm:$0xff]
  %v375 = vld [vmem:[%s364 + $0x50] sm:$0xff]
  %v376 = vld [vmem:[%s364 + $0x58] sm:$0xff]
  %v377 = vld [vmem:[%s364 + $0x60] sm:$0xff]
  %v378 = vld [vmem:[%s364 + $0x68] sm:$0xff]
  %v379 = vld [vmem:[%s364 + $0x70] sm:$0xff]
  %v380 = vld [vmem:[%s364 + $0x78] sm:$0xff]
  %v381 = vld [vmem:[%s364 + $0x80] sm:$0xff]
  %v382 = vld [vmem:[%s364 + $0x88] sm:$0xff]
  %v383 = vld [vmem:[%s364 + $0x90] sm:$0xff]
  %v384 = vld [vmem:[%s364 + $0x98] sm:$0xff]
  %v386 = vsel %vm52, %v366, 0
  %v389 = vsel %vm52, %v368, 0
  %v392 = vsel %vm52, %v370, 0
  %v395 = vsel %vm52, %v372, 0
  %v398 = vsel %vm52, %v374, 0
  %v401 = vsel %vm52, %v376, 0
  %v404 = vsel %vm52, %v378, 0
  %v407 = vsel %vm52, %v380, 0
  %v410 = vsel %vm52, %v382, 0
  %v413 = vsel %vm52, %v384, 0
  %415 = vmatprep.subr.mxu0 0.0
  %416 = vmatpush1.msra.mxu0 %v29
  %417 = vmatprep.subr.mxu0 0.0
  %418 = vmatpush1.msra.mxu0 %v28
  %419 = vmatprep.subr.mxu0 0.0
  %420 = vmatpush1.msra.mxu0 %v27
  %421 = vmatprep.subr.mxu0 0.0
  %422 = vmatpush1.msra.mxu0 %v26
  %423 = vmatprep.subr.mxu0 0.0
  %424 = vmatpush1.msra.mxu0 %v25
  %425 = vmatprep.subr.mxu0 0.0
  %426 = vmatpush1.msra.mxu0 %v24
  %427 = vmatprep.subr.mxu0 0.0
  %428 = vmatpush1.msra.mxu0 %v23
  %429 = vmatprep.subr.mxu0 0.0
  %430 = vmatpush1.msra.mxu0 %v22
  %431 = vmatprep.subr.mxu0 0.0
  %432 = vmatpush1.msra.mxu0 %v21
  %433 = vmatprep.subr.mxu0 0.0
  %434 = vmatpush1.msra.mxu0 %v20
  %435 = vmatprep.subr.mxu0 0.0
  %436 = vmatpush1.msra.mxu0 %v19
  %437 = vmatprep.subr.mxu0 0.0
  %438 = vmatpush1.msra.mxu0 %v18
  %439 = vmatprep.subr.mxu0 0.0
  %440 = vmatpush1.msra.mxu0 %v17
  %441 = vmatprep.subr.mxu0 0.0
  %442 = vmatpush1.msra.mxu0 %v16
  %443 = vmatprep.subr.mxu0 0.0
  %444 = vmatpush1.msra.mxu0 %v15
  %445 = vmatprep.subr.mxu0 0.0
  %446 = vmatpush1.msra.mxu0 %v14
  %447 = vmatprep.subr.mxu0 0.0
  %448 = vmatpush2.msra.mxu0 0.0
  %449 = vmatprep.subr.mxu0 0.0
  %450 = vmatpush2.msra.mxu0 0.0
  %451 = vmatprep.subr.mxu0 0.0
  %452 = vmatpush2.msra.mxu0 0.0
  %453 = vmatprep.subr.mxu0 0.0
  %454 = vmatpush2.msra.mxu0 0.0
  %455 = vmatprep.subr.mxu0 0.0
  %456 = vmatpush2.msra.mxu0 0.0
  %457 = vmatprep.subr.mxu0 0.0
  %458 = vmatpush2.msra.mxu0 0.0
  %459 = vmatprep.subr.mxu0 0.0
  %460 = vmatpush2.msra.mxu0 0.0
  %461 = vmatprep.subr.mxu0 0.0
  %462 = vmatpush2.msra.mxu0 0.0
  %463 = vmatprep.subr.mxu0 0.0
  %464 = vmatpush2.msra.mxu0 0.0
  %465 = vmatprep.subr.mxu0 0.0
  %466 = vmatpush2.msra.mxu0 0.0
  %467 = vmatprep.subr.mxu0 0.0
  %468 = vmatpush2.msra.mxu0 0.0
  %469 = vmatprep.subr.mxu0 0.0
  %470 = vmatpush2.msra.mxu0 0.0
  %471 = vmatprep.subr.mxu0 0.0
  %472 = vmatpush2.msra.mxu0 0.0
  %473 = vmatprep.subr.mxu0 0.0
  %474 = vmatpush2.msra.mxu0 0.0
  %475 = vmatprep.subr.mxu0 0.0
  %476 = vmatpush2.msra.mxu0 %v31
  %477 = vmatprep.subr.mxu0 0.0
  %478 = vmatpush2.msra.mxu0 %v30
  %479 = vmatprep.mubr.f32.mxu0 %v386
  %480 = vmatmul.mubr.f32.gmra.mxu0 %v365
  %v481 = vpop.f32.mrf.mxu0
  %v482 = vadd.f32 0.0, %v481
  %v483 = vpop.f32.mrf.mxu0
  %484 = vmatprep.mubr.f32.mxu0 %v389
  %485 = vmatmul.mubr.f32.gmra.mxu0 %v367
  %v486 = vpop.f32.mrf.mxu0
  %v487 = vadd.f32 0.0, %v486
  %v488 = vpop.f32.mrf.mxu0
  %489 = vmatprep.mubr.f32.mxu0 %v392
  %490 = vmatmul.mubr.f32.gmra.mxu0 %v369
  %v491 = vpop.f32.mrf.mxu0
  %v492 = vadd.f32 0.0, %v491
  %v493 = vpop.f32.mrf.mxu0
  %494 = vmatprep.mubr.f32.mxu0 %v395
  %495 = vmatmul.mubr.f32.gmra.mxu0 %v371
  %v496 = vpop.f32.mrf.mxu0
  %v497 = vadd.f32 0.0, %v496
  %v498 = vpop.f32.mrf.mxu0
  %499 = vmatprep.mubr.f32.mxu0 %v398
  %500 = vmatmul.mubr.f32.gmra.mxu0 %v373
  %v501 = vpop.f32.mrf.mxu0
  %v502 = vadd.f32 0.0, %v501
  %v503 = vpop.f32.mrf.mxu0
  %504 = vmatprep.mubr.f32.mxu0 %v401
  %505 = vmatmul.mubr.f32.gmra.mxu0 %v375
  %v506 = vpop.f32.mrf.mxu0
  %v507 = vadd.f32 0.0, %v506
  %v508 = vpop.f32.mrf.mxu0
  %509 = vmatprep.mubr.f32.mxu0 %v404
  %510 = vmatmul.mubr.f32.gmra.mxu0 %v377
  %v511 = vpop.f32.mrf.mxu0
  %v512 = vadd.f32 0.0, %v511
  %v513 = vpop.f32.mrf.mxu0
  %514 = vmatprep.mubr.f32.mxu0 %v407
  %515 = vmatmul.mubr.f32.gmra.mxu0 %v379
  %v516 = vpop.f32.mrf.mxu0
  %v517 = vadd.f32 0.0, %v516
  %v518 = vpop.f32.mrf.mxu0
  %519 = vmatprep.mubr.f32.mxu0 %v410
  %520 = vmatmul.mubr.f32.gmra.mxu0 %v381
  %v521 = vpop.f32.mrf.mxu0
  %v522 = vadd.f32 0.0, %v521
  %v523 = vpop.f32.mrf.mxu0
  %524 = vmatprep.mubr.f32.mxu0 %v413
  %525 = vmatmul.mubr.f32.gmra.mxu0 %v383
  %v526 = vpop.f32.mrf.mxu0
  %v527 = vadd.f32 0.0, %v526
  %v528 = vpop.f32.mrf.mxu0
  %529 = vdwg.mxu0
  %s530 = scalar_lea.vmem %s0, 480
  %v531 = vld [vmem:[%s530] sm:$0xff]
  %v532 = vld [vmem:[%s530 + $0x8] sm:$0xff]
  %v533 = vld [vmem:[%s530 + $0x10] sm:$0xff]
  %v534 = vld [vmem:[%s530 + $0x18] sm:$0xff]
  %v535 = vld [vmem:[%s530 + $0x20] sm:$0xff]
  %v536 = vld [vmem:[%s530 + $0x28] sm:$0xff]
  %v537 = vld [vmem:[%s530 + $0x30] sm:$0xff]
  %v538 = vld [vmem:[%s530 + $0x38] sm:$0xff]
  %v539 = vld [vmem:[%s530 + $0x40] sm:$0xff]
  %v540 = vld [vmem:[%s530 + $0x48] sm:$0xff]
  %v541 = vld [vmem:[%s530 + $0x50] sm:$0xff]
  %v542 = vld [vmem:[%s530 + $0x58] sm:$0xff]
  %v543 = vld [vmem:[%s530 + $0x60] sm:$0xff]
  %v544 = vld [vmem:[%s530 + $0x68] sm:$0xff]
  %v545 = vld [vmem:[%s530 + $0x70] sm:$0xff]
  %v546 = vld [vmem:[%s530 + $0x78] sm:$0xff]
  %v547 = vld [vmem:[%s530 + $0x80] sm:$0xff]
  %v548 = vld [vmem:[%s530 + $0x88] sm:$0xff]
  %v549 = vld [vmem:[%s530 + $0x90] sm:$0xff]
  %v550 = vld [vmem:[%s530 + $0x98] sm:$0xff]
  %v552 = vsel %vm52, %v532, 0
  %v555 = vsel %vm52, %v534, 0
  %v558 = vsel %vm52, %v536, 0
  %v561 = vsel %vm52, %v538, 0
  %v564 = vsel %vm52, %v540, 0
  %v567 = vsel %vm52, %v542, 0
  %v570 = vsel %vm52, %v544, 0
  %v573 = vsel %vm52, %v546, 0
  %v576 = vsel %vm52, %v548, 0
  %v579 = vsel %vm52, %v550, 0
  %581 = vmatprep.subr.mxu0 0.0
  %582 = vmatpush1.msra.mxu0 %v29
  %583 = vmatprep.subr.mxu0 0.0
  %584 = vmatpush1.msra.mxu0 %v28
  %585 = vmatprep.subr.mxu0 0.0
  %586 = vmatpush1.msra.mxu0 %v27
  %587 = vmatprep.subr.mxu0 0.0
  %588 = vmatpush1.msra.mxu0 %v26
  %589 = vmatprep.subr.mxu0 0.0
  %590 = vmatpush1.msra.mxu0 %v25
  %591 = vmatprep.subr.mxu0 0.0
  %592 = vmatpush1.msra.mxu0 %v24
  %593 = vmatprep.subr.mxu0 0.0
  %594 = vmatpush1.msra.mxu0 %v23
  %595 = vmatprep.subr.mxu0 0.0
  %596 = vmatpush1.msra.mxu0 %v22
  %597 = vmatprep.subr.mxu0 0.0
  %598 = vmatpush1.msra.mxu0 %v21
  %599 = vmatprep.subr.mxu0 0.0
  %600 = vmatpush1.msra.mxu0 %v20
  %601 = vmatprep.subr.mxu0 0.0
  %602 = vmatpush1.msra.mxu0 %v19
  %603 = vmatprep.subr.mxu0 0.0
  %604 = vmatpush1.msra.mxu0 %v18
  %605 = vmatprep.subr.mxu0 0.0
  %606 = vmatpush1.msra.mxu0 %v17
  %607 = vmatprep.subr.mxu0 0.0
  %608 = vmatpush1.msra.mxu0 %v16
  %609 = vmatprep.subr.mxu0 0.0
  %610 = vmatpush1.msra.mxu0 %v15
  %611 = vmatprep.subr.mxu0 0.0
  %612 = vmatpush1.msra.mxu0 %v14
  %613 = vmatprep.subr.mxu0 0.0
  %614 = vmatpush2.msra.mxu0 0.0
  %615 = vmatprep.subr.mxu0 0.0
  %616 = vmatpush2.msra.mxu0 0.0
  %617 = vmatprep.subr.mxu0 0.0
  %618 = vmatpush2.msra.mxu0 0.0
  %619 = vmatprep.subr.mxu0 0.0
  %620 = vmatpush2.msra.mxu0 0.0
  %621 = vmatprep.subr.mxu0 0.0
  %622 = vmatpush2.msra.mxu0 0.0
  %623 = vmatprep.subr.mxu0 0.0
  %624 = vmatpush2.msra.mxu0 0.0
  %625 = vmatprep.subr.mxu0 0.0
  %626 = vmatpush2.msra.mxu0 0.0
  %627 = vmatprep.subr.mxu0 0.0
  %628 = vmatpush2.msra.mxu0 0.0
  %629 = vmatprep.subr.mxu0 0.0
  %630 = vmatpush2.msra.mxu0 0.0
  %631 = vmatprep.subr.mxu0 0.0
  %632 = vmatpush2.msra.mxu0 0.0
  %633 = vmatprep.subr.mxu0 0.0
  %634 = vmatpush2.msra.mxu0 0.0
  %635 = vmatprep.subr.mxu0 0.0
  %636 = vmatpush2.msra.mxu0 0.0
  %637 = vmatprep.subr.mxu0 0.0
  %638 = vmatpush2.msra.mxu0 0.0
  %639 = vmatprep.subr.mxu0 0.0
  %640 = vmatpush2.msra.mxu0 0.0
  %641 = vmatprep.subr.mxu0 0.0
  %642 = vmatpush2.msra.mxu0 %v31
  %643 = vmatprep.subr.mxu0 0.0
  %644 = vmatpush2.msra.mxu0 %v30
  %645 = vmatprep.mubr.f32.mxu0 %v552
  %646 = vmatmul.mubr.f32.gmra.mxu0 %v531
  %v647 = vpop.f32.mrf.mxu0
  %v648 = vadd.f32 0.0, %v647
  %v649 = vpop.f32.mrf.mxu0
  %650 = vmatprep.mubr.f32.mxu0 %v555
  %651 = vmatmul.mubr.f32.gmra.mxu0 %v533
  %v652 = vpop.f32.mrf.mxu0
  %v653 = vadd.f32 0.0, %v652
  %v654 = vpop.f32.mrf.mxu0
  %655 = vmatprep.mubr.f32.mxu0 %v558
  %656 = vmatmul.mubr.f32.gmra.mxu0 %v535
  %v657 = vpop.f32.mrf.mxu0
  %v658 = vadd.f32 0.0, %v657
  %v659 = vpop.f32.mrf.mxu0
  %660 = vmatprep.mubr.f32.mxu0 %v561
  %661 = vmatmul.mubr.f32.gmra.mxu0 %v537
  %v662 = vpop.f32.mrf.mxu0
  %v663 = vadd.f32 0.0, %v662
  %v664 = vpop.f32.mrf.mxu0
  %665 = vmatprep.mubr.f32.mxu0 %v564
  %666 = vmatmul.mubr.f32.gmra.mxu0 %v539
  %v667 = vpop.f32.mrf.mxu0
  %v668 = vadd.f32 0.0, %v667
  %v669 = vpop.f32.mrf.mxu0
  %670 = vmatprep.mubr.f32.mxu0 %v567
  %671 = vmatmul.mubr.f32.gmra.mxu0 %v541
  %v672 = vpop.f32.mrf.mxu0
  %v673 = vadd.f32 0.0, %v672
  %v674 = vpop.f32.mrf.mxu0
  %675 = vmatprep.mubr.f32.mxu0 %v570
  %676 = vmatmul.mubr.f32.gmra.mxu0 %v543
  %v677 = vpop.f32.mrf.mxu0
  %v678 = vadd.f32 0.0, %v677
  %v679 = vpop.f32.mrf.mxu0
  %680 = vmatprep.mubr.f32.mxu0 %v573
  %681 = vmatmul.mubr.f32.gmra.mxu0 %v545
  %v682 = vpop.f32.mrf.mxu0
  %v683 = vadd.f32 0.0, %v682
  %v684 = vpop.f32.mrf.mxu0
  %685 = vmatprep.mubr.f32.mxu0 %v576
  %686 = vmatmul.mubr.f32.gmra.mxu0 %v547
  %v687 = vpop.f32.mrf.mxu0
  %v688 = vadd.f32 0.0, %v687
  %v689 = vpop.f32.mrf.mxu0
  %690 = vmatprep.mubr.f32.mxu0 %v579
  %691 = vmatmul.mubr.f32.gmra.mxu0 %v549
  %v692 = vpop.f32.mrf.mxu0
  %v693 = vadd.f32 0.0, %v692
  %v694 = vpop.f32.mrf.mxu0
  %695 = vdwg.mxu0
  %v696 = vmax.f32 %v150, %v316
  %v697 = vmax.f32 %v155, %v321
  %v698 = vmax.f32 %v160, %v326
  %v699 = vmax.f32 %v165, %v331
  %v700 = vmax.f32 %v170, %v336
  %v701 = vmax.f32 %v175, %v341
  %v702 = vmax.f32 %v180, %v346
  %v703 = vmax.f32 %v185, %v351
  %v704 = vmax.f32 %v190, %v356
  %v705 = vmax.f32 %v195, %v361
  %v706 = vmax.f32 %v482, %v648
  %v707 = vmax.f32 %v487, %v653
  %v708 = vmax.f32 %v492, %v658
  %v709 = vmax.f32 %v497, %v663
  %v710 = vmax.f32 %v502, %v668
  %v711 = vmax.f32 %v507, %v673
  %v712 = vmax.f32 %v512, %v678
  %v713 = vmax.f32 %v517, %v683
  %v714 = vmax.f32 %v522, %v688
  %v715 = vmax.f32 %v527, %v693
  %v716 = vmax.f32 %v696, %v706
  %v717 = vmax.f32 %v697, %v707
  %v718 = vmax.f32 %v698, %v708
  %v719 = vmax.f32 %v699, %v709
  %v720 = vmax.f32 %v700, %v710
  %v721 = vmax.f32 %v701, %v711
  %v722 = vmax.f32 %v702, %v712
  %v723 = vmax.f32 %v703, %v713
  %v724 = vmax.f32 %v704, %v714
  %v725 = vmax.f32 %v705, %v715
  %v726 = vld [vmem:[%s2] sm:$0x1]
  %v728 = vlaneseq
  %v729 = vshrl.u32 %v728, 7
  %v730 = vsub.s32 0, %v729
  %v731 = vrot.slane %v726, %v730
  %v733 = vadd.f32 %v716, %v731
  %v734 = vadd.f32 %v717, %v731
  %v735 = vadd.f32 %v718, %v731
  %v736 = vadd.f32 %v719, %v731
  %v737 = vadd.f32 %v720, %v731
  %v738 = vadd.f32 %v721, %v731
  %v739 = vadd.f32 %v722, %v731
  %v740 = vadd.f32 %v723, %v731
  %v741 = vadd.f32 %v724, %v731
  %v742 = vadd.f32 %v725, %v731
  %v743 = vmax.f32 %v733, 0.0
  %v744 = vmax.f32 %v734, 0.0
  %v745 = vmax.f32 %v735, 0.0
  %v746 = vmax.f32 %v736, 0.0
  %v747 = vmax.f32 %v737, 0.0
  %v748 = vmax.f32 %v738, 0.0
  %v749 = vmax.f32 %v739, 0.0
  %v750 = vmax.f32 %v740, 0.0
  %v751 = vmax.f32 %v741, 0.0
  %v752 = vmax.f32 %v742, 0.0
  %vm753 = vcmask 261120
  %754 = vst.msk [vmem:[%s3] sm:$0xff] %vm753, %v743
  %755 = vst.msk [vmem:[%s3 + $0x8] sm:$0xff] %vm753, %v744
  %756 = vst.msk [vmem:[%s3 + $0x10] sm:$0xff] %vm753, %v745
  %757 = vst.msk [vmem:[%s3 + $0x18] sm:$0xff] %vm753, %v746
  %758 = vst.msk [vmem:[%s3 + $0x20] sm:$0xff] %vm753, %v747
  %759 = vst.msk [vmem:[%s3 + $0x28] sm:$0xff] %vm753, %v748
  %760 = vst.msk [vmem:[%s3 + $0x30] sm:$0xff] %vm753, %v749
  %761 = vst.msk [vmem:[%s3 + $0x38] sm:$0xff] %vm753, %v750
  %762 = vst.msk [vmem:[%s3 + $0x40] sm:$0xff] %vm753, %v751
  %763 = vst.msk [vmem:[%s3 + $0x48] sm:$0xff] %vm753, %v752
  // Predicated region
  $region14: #{net1_forward.4} parent=0 // pred_check
    _
  $region15: #{net1_forward.4} parent=0 // pred_check_branch
    %765 = sbr.rel (0) target = $region17
  $region16: #{net1_forward.4} parent=0 // pred_region
    _
  $region17: #{net1_forward.4} parent=0 // pred_fallthru
    _
  // Predicated region
  $region18: #{net1_forward.4} parent=0 // pred_check
    _
  $region19: #{net1_forward.4} parent=0 // pred_check_branch
    %767 = sbr.rel (0) target = $region21
  $region20: #{net1_forward.4} parent=0 // pred_region
    _
  $region21: #{net1_forward.4} parent=0 // pred_fallthru
    _

// kernel: net1_forward.5
$region0: #{net1_forward.5}
  #allocation0 [shape = 'u32[]', space=smem, size = 0x4, offset = 0x4, fixed_abs, tag = 'smem constant byte address 0x4 - core index']
  #allocation1 [shape = 'u32[144,128]{1,0:T(1,128)}', space=vmem, size = 0x12000, scoped, tag = 'internal scratch']
  %s0 = inlined_call_operand.vmem [shape: f32[8,1152], index: 0, kind: input, shape index: {}]
  %s1 = inlined_call_operand.vmem [shape: f32[1152,10], index: 1, kind: input, shape index: {}]
  %s2 = inlined_call_operand.vmem [shape: f32[1,10], index: 2, kind: input, shape index: {}]
  %s3 = inlined_call_operand.vmem [shape: f32[8,10], index: 3, kind: output, shape index: {}]
  %s4 = sld [smem:[#allocation0]]
  $region22: #{net1_forward.5} parent=0
    _
  %s6 = ssub.s32 1, %s4
  %s7 = scalar_select 0, %s6, %s4
  // Predicated region
  $region2: #{net1_forward.5} parent=0 // pred_check
    _
  $region3: #{net1_forward.5} parent=0 // pred_check_branch
    %9 = sbr.rel (0) target = $region5
  $region4: #{net1_forward.5} parent=0 // pred_region
    _
  $region5: #{net1_forward.5} parent=0 // pred_fallthru
    _
  // Predicated region
  $region6: #{net1_forward.5} parent=0 // pred_check
    _
  $region7: #{net1_forward.5} parent=0 // pred_check_branch
    %11 = sbr.rel (0) target = $region9
  $region8: #{net1_forward.5} parent=0 // pred_region
    _
  $region9: #{net1_forward.5} parent=0 // pred_fallthru
    _
  // Predicated region
  $region10: #{net1_forward.5} parent=0 // pred_check
    _
  $region11: #{net1_forward.5} parent=0 // pred_check_branch
    %13 = sbr.rel (0) target = $region13
  $region12: #{net1_forward.5} parent=0 // pred_region
    _
  $region13: #{net1_forward.5} parent=0 // pred_fallthru
    _
  %v14 = vld [vmem:[%s0] sm:$0xff]
  %v15 = vld [vmem:[%s0 + $0x8] sm:$0xff]
  %v16 = vld [vmem:[%s0 + $0x10] sm:$0xff]
  %v17 = vld [vmem:[%s0 + $0x18] sm:$0xff]
  %v18 = vld [vmem:[%s0 + $0x20] sm:$0xff]
  %v19 = vld [vmem:[%s0 + $0x28] sm:$0xff]
  %v20 = vld [vmem:[%s0 + $0x30] sm:$0xff]
  %v21 = vld [vmem:[%s0 + $0x38] sm:$0xff]
  %v22 = vld [vmem:[%s0 + $0x40] sm:$0xff]
  %v23 = vld [vmem:[%s1] sm:$0xff]
  %v24 = vld [vmem:[%s1 + $0x8] sm:$0xff]
  %v25 = vld [vmem:[%s1 + $0x10] sm:$0xff]
  %v26 = vld [vmem:[%s1 + $0x18] sm:$0xff]
  %v27 = vld [vmem:[%s1 + $0x20] sm:$0xff]
  %v28 = vld [vmem:[%s1 + $0x28] sm:$0xff]
  %v29 = vld [vmem:[%s1 + $0x30] sm:$0xff]
  %v30 = vld [vmem:[%s1 + $0x38] sm:$0xff]
  %v31 = vld [vmem:[%s1 + $0x40] sm:$0xff]
  %v32 = vld [vmem:[%s1 + $0x48] sm:$0xff]
  %v33 = vld [vmem:[%s1 + $0x50] sm:$0xff]
  %v34 = vld [vmem:[%s1 + $0x58] sm:$0xff]
  %v35 = vld [vmem:[%s1 + $0x60] sm:$0xff]
  %v36 = vld [vmem:[%s1 + $0x68] sm:$0xff]
  %v37 = vld [vmem:[%s1 + $0x70] sm:$0xff]
  %v38 = vld [vmem:[%s1 + $0x78] sm:$0xff]
  %v39 = vld [vmem:[%s1 + $0x80] sm:$0xff]
  %v40 = vld [vmem:[%s1 + $0x88] sm:$0xff]
  %v41 = vld [vmem:[%s1 + $0x90] sm:$0xff]
  %v42 = vld [vmem:[%s1 + $0x98] sm:$0xff]
  %v43 = vld [vmem:[%s1 + $0xa0] sm:$0xff]
  %v44 = vld [vmem:[%s1 + $0xa8] sm:$0xff]
  %v45 = vld [vmem:[%s1 + $0xb0] sm:$0xff]
  %v46 = vld [vmem:[%s1 + $0xb8] sm:$0xff]
  %v47 = vld [vmem:[%s1 + $0xc0] sm:$0xff]
  %v48 = vld [vmem:[%s1 + $0xc8] sm:$0xff]
  %v49 = vld [vmem:[%s1 + $0xd0] sm:$0xff]
  %v50 = vld [vmem:[%s1 + $0xd8] sm:$0xff]
  %v51 = vld [vmem:[%s1 + $0xe0] sm:$0xff]
  %v52 = vld [vmem:[%s1 + $0xe8] sm:$0xff]
  %v53 = vld [vmem:[%s1 + $0xf0] sm:$0xff]
  %v54 = vld [vmem:[%s1 + $0xf8] sm:$0xff]
  %v55 = vld [vmem:[%s1 + $0x100] sm:$0xff]
  %v56 = vld [vmem:[%s1 + $0x108] sm:$0xff]
  %v57 = vld [vmem:[%s1 + $0x110] sm:$0xff]
  %v58 = vld [vmem:[%s1 + $0x118] sm:$0xff]
  %v59 = vld [vmem:[%s1 + $0x120] sm:$0xff]
  %v60 = vld [vmem:[%s1 + $0x128] sm:$0xff]
  %v61 = vld [vmem:[%s1 + $0x130] sm:$0xff]
  %v62 = vld [vmem:[%s1 + $0x138] sm:$0xff]
  %v63 = vld [vmem:[%s1 + $0x140] sm:$0xff]
  %v64 = vld [vmem:[%s1 + $0x148] sm:$0xff]
  %v65 = vld [vmem:[%s1 + $0x150] sm:$0xff]
  %v66 = vld [vmem:[%s1 + $0x158] sm:$0xff]
  %v67 = vld [vmem:[%s1 + $0x160] sm:$0xff]
  %v68 = vld [vmem:[%s1 + $0x168] sm:$0xff]
  %v69 = vld [vmem:[%s1 + $0x170] sm:$0xff]
  %v70 = vld [vmem:[%s1 + $0x178] sm:$0xff]
  %v71 = vld [vmem:[%s1 + $0x180] sm:$0xff]
  %v72 = vld [vmem:[%s1 + $0x188] sm:$0xff]
  %v73 = vld [vmem:[%s1 + $0x190] sm:$0xff]
  %v74 = vld [vmem:[%s1 + $0x198] sm:$0xff]
  %v75 = vld [vmem:[%s1 + $0x1a0] sm:$0xff]
  %v76 = vld [vmem:[%s1 + $0x1a8] sm:$0xff]
  %v77 = vld [vmem:[%s1 + $0x1b0] sm:$0xff]
  %v78 = vld [vmem:[%s1 + $0x1b8] sm:$0xff]
  %v79 = vld [vmem:[%s1 + $0x1c0] sm:$0xff]
  %v80 = vld [vmem:[%s1 + $0x1c8] sm:$0xff]
  %v81 = vld [vmem:[%s1 + $0x1d0] sm:$0xff]
  %v82 = vld [vmem:[%s1 + $0x1d8] sm:$0xff]
  %v83 = vld [vmem:[%s1 + $0x1e0] sm:$0xff]
  %v84 = vld [vmem:[%s1 + $0x1e8] sm:$0xff]
  %v85 = vld [vmem:[%s1 + $0x1f0] sm:$0xff]
  %v86 = vld [vmem:[%s1 + $0x1f8] sm:$0xff]
  %v87 = vld [vmem:[%s1 + $0x200] sm:$0xff]
  %v88 = vld [vmem:[%s1 + $0x208] sm:$0xff]
  %v89 = vld [vmem:[%s1 + $0x210] sm:$0xff]
  %v90 = vld [vmem:[%s1 + $0x218] sm:$0xff]
  %v91 = vld [vmem:[%s1 + $0x220] sm:$0xff]
  %v92 = vld [vmem:[%s1 + $0x228] sm:$0xff]
  %v93 = vld [vmem:[%s1 + $0x230] sm:$0xff]
  %v94 = vld [vmem:[%s1 + $0x238] sm:$0xff]
  %v95 = vld [vmem:[%s1 + $0x240] sm:$0xff]
  %v96 = vld [vmem:[%s1 + $0x248] sm:$0xff]
  %v97 = vld [vmem:[%s1 + $0x250] sm:$0xff]
  %v98 = vld [vmem:[%s1 + $0x258] sm:$0xff]
  %v99 = vld [vmem:[%s1 + $0x260] sm:$0xff]
  %v100 = vld [vmem:[%s1 + $0x268] sm:$0xff]
  %v101 = vld [vmem:[%s1 + $0x270] sm:$0xff]
  %v102 = vld [vmem:[%s1 + $0x278] sm:$0xff]
  %v103 = vld [vmem:[%s1 + $0x280] sm:$0xff]
  %v104 = vld [vmem:[%s1 + $0x288] sm:$0xff]
  %v105 = vld [vmem:[%s1 + $0x290] sm:$0xff]
  %v106 = vld [vmem:[%s1 + $0x298] sm:$0xff]
  %v107 = vld [vmem:[%s1 + $0x2a0] sm:$0xff]
  %v108 = vld [vmem:[%s1 + $0x2a8] sm:$0xff]
  %v109 = vld [vmem:[%s1 + $0x2b0] sm:$0xff]
  %v110 = vld [vmem:[%s1 + $0x2b8] sm:$0xff]
  %v111 = vld [vmem:[%s1 + $0x2c0] sm:$0xff]
  %v112 = vld [vmem:[%s1 + $0x2c8] sm:$0xff]
  %v113 = vld [vmem:[%s1 + $0x2d0] sm:$0xff]
  %v114 = vld [vmem:[%s1 + $0x2d8] sm:$0xff]
  %v115 = vld [vmem:[%s1 + $0x2e0] sm:$0xff]
  %v116 = vld [vmem:[%s1 + $0x2e8] sm:$0xff]
  %v117 = vld [vmem:[%s1 + $0x2f0] sm:$0xff]
  %v118 = vld [vmem:[%s1 + $0x2f8] sm:$0xff]
  %v119 = vld [vmem:[%s1 + $0x300] sm:$0xff]
  %v120 = vld [vmem:[%s1 + $0x308] sm:$0xff]
  %v121 = vld [vmem:[%s1 + $0x310] sm:$0xff]
  %v122 = vld [vmem:[%s1 + $0x318] sm:$0xff]
  %v123 = vld [vmem:[%s1 + $0x320] sm:$0xff]
  %v124 = vld [vmem:[%s1 + $0x328] sm:$0xff]
  %v125 = vld [vmem:[%s1 + $0x330] sm:$0xff]
  %v126 = vld [vmem:[%s1 + $0x338] sm:$0xff]
  %v127 = vld [vmem:[%s1 + $0x340] sm:$0xff]
  %v128 = vld [vmem:[%s1 + $0x348] sm:$0xff]
  %v129 = vld [vmem:[%s1 + $0x350] sm:$0xff]
  %v130 = vld [vmem:[%s1 + $0x358] sm:$0xff]
  %v131 = vld [vmem:[%s1 + $0x360] sm:$0xff]
  %v132 = vld [vmem:[%s1 + $0x368] sm:$0xff]
  %v133 = vld [vmem:[%s1 + $0x370] sm:$0xff]
  %v134 = vld [vmem:[%s1 + $0x378] sm:$0xff]
  %v135 = vld [vmem:[%s1 + $0x380] sm:$0xff]
  %v136 = vld [vmem:[%s1 + $0x388] sm:$0xff]
  %v137 = vld [vmem:[%s1 + $0x390] sm:$0xff]
  %v138 = vld [vmem:[%s1 + $0x398] sm:$0xff]
  %v139 = vld [vmem:[%s1 + $0x3a0] sm:$0xff]
  %v140 = vld [vmem:[%s1 + $0x3a8] sm:$0xff]
  %v141 = vld [vmem:[%s1 + $0x3b0] sm:$0xff]
  %v142 = vld [vmem:[%s1 + $0x3b8] sm:$0xff]
  %v143 = vld [vmem:[%s1 + $0x3c0] sm:$0xff]
  %v144 = vld [vmem:[%s1 + $0x3c8] sm:$0xff]
  %v145 = vld [vmem:[%s1 + $0x3d0] sm:$0xff]
  %v146 = vld [vmem:[%s1 + $0x3d8] sm:$0xff]
  %v147 = vld [vmem:[%s1 + $0x3e0] sm:$0xff]
  %v148 = vld [vmem:[%s1 + $0x3e8] sm:$0xff]
  %v149 = vld [vmem:[%s1 + $0x3f0] sm:$0xff]
  %v150 = vld [vmem:[%s1 + $0x3f8] sm:$0xff]
  %v151 = vld [vmem:[%s1 + $0x400] sm:$0xff]
  %v152 = vld [vmem:[%s1 + $0x408] sm:$0xff]
  %v153 = vld [vmem:[%s1 + $0x410] sm:$0xff]
  %v154 = vld [vmem:[%s1 + $0x418] sm:$0xff]
  %v155 = vld [vmem:[%s1 + $0x420] sm:$0xff]
  %v156 = vld [vmem:[%s1 + $0x428] sm:$0xff]
  %v157 = vld [vmem:[%s1 + $0x430] sm:$0xff]
  %v158 = vld [vmem:[%s1 + $0x438] sm:$0xff]
  %v159 = vld [vmem:[%s1 + $0x440] sm:$0xff]
  %v160 = vld [vmem:[%s1 + $0x448] sm:$0xff]
  %v161 = vld [vmem:[%s1 + $0x450] sm:$0xff]
  %v162 = vld [vmem:[%s1 + $0x458] sm:$0xff]
  %v163 = vld [vmem:[%s1 + $0x460] sm:$0xff]
  %v164 = vld [vmem:[%s1 + $0x468] sm:$0xff]
  %v165 = vld [vmem:[%s1 + $0x470] sm:$0xff]
  %v166 = vld [vmem:[%s1 + $0x478] sm:$0xff]
  %v167 = vld [vmem:[%s2] sm:$0x1]
  %v169 = vlaneseq
  %v170 = vshrl.u32 %v169, 7
  %v171 = vsub.s32 0, %v170
  %v172 = vrot.slane %v167, %v171
  %174 = vmatprep.subr.mxu0 0.0
  %175 = vmatpush1.msra.mxu0 %v38
  %176 = vmatprep.subr.mxu0 0.0
  %177 = vmatpush1.msra.mxu0 %v37
  %178 = vmatprep.subr.mxu0 0.0
  %179 = vmatpush1.msra.mxu0 %v36
  %180 = vmatprep.subr.mxu0 0.0
  %181 = vmatpush1.msra.mxu0 %v35
  %182 = vmatprep.subr.mxu0 0.0
  %183 = vmatpush1.msra.mxu0 %v34
  %184 = vmatprep.subr.mxu0 0.0
  %185 = vmatpush1.msra.mxu0 %v33
  %186 = vmatprep.subr.mxu0 0.0
  %187 = vmatpush1.msra.mxu0 %v32
  %188 = vmatprep.subr.mxu0 0.0
  %189 = vmatpush1.msra.mxu0 %v31
  %190 = vmatprep.subr.mxu0 0.0
  %191 = vmatpush1.msra.mxu0 %v30
  %192 = vmatprep.subr.mxu0 0.0
  %193 = vmatpush1.msra.mxu0 %v29
  %194 = vmatprep.subr.mxu0 0.0
  %195 = vmatpush1.msra.mxu0 %v28
  %196 = vmatprep.subr.mxu0 0.0
  %197 = vmatpush1.msra.mxu0 %v27
  %198 = vmatprep.subr.mxu0 0.0
  %199 = vmatpush1.msra.mxu0 %v26
  %200 = vmatprep.subr.mxu0 0.0
  %201 = vmatpush1.msra.mxu0 %v25
  %202 = vmatprep.subr.mxu0 0.0
  %203 = vmatpush1.msra.mxu0 %v24
  %204 = vmatprep.subr.mxu0 0.0
  %205 = vmatpush1.msra.mxu0 %v23
  %206 = vmatprep.subr.mxu0 0.0
  %207 = vmatpush2.msra.mxu0 %v54
  %208 = vmatprep.subr.mxu0 0.0
  %209 = vmatpush2.msra.mxu0 %v53
  %210 = vmatprep.subr.mxu0 0.0
  %211 = vmatpush2.msra.mxu0 %v52
  %212 = vmatprep.subr.mxu0 0.0
  %213 = vmatpush2.msra.mxu0 %v51
  %214 = vmatprep.subr.mxu0 0.0
  %215 = vmatpush2.msra.mxu0 %v50
  %216 = vmatprep.subr.mxu0 0.0
  %217 = vmatpush2.msra.mxu0 %v49
  %218 = vmatprep.subr.mxu0 0.0
  %219 = vmatpush2.msra.mxu0 %v48
  %220 = vmatprep.subr.mxu0 0.0
  %221 = vmatpush2.msra.mxu0 %v47
  %222 = vmatprep.subr.mxu0 0.0
  %223 = vmatpush2.msra.mxu0 %v46
  %224 = vmatprep.subr.mxu0 0.0
  %225 = vmatpush2.msra.mxu0 %v45
  %226 = vmatprep.subr.mxu0 0.0
  %227 = vmatpush2.msra.mxu0 %v44
  %228 = vmatprep.subr.mxu0 0.0
  %229 = vmatpush2.msra.mxu0 %v43
  %230 = vmatprep.subr.mxu0 0.0
  %231 = vmatpush2.msra.mxu0 %v42
  %232 = vmatprep.subr.mxu0 0.0
  %233 = vmatpush2.msra.mxu0 %v41
  %234 = vmatprep.subr.mxu0 0.0
  %235 = vmatpush2.msra.mxu0 %v40
  %236 = vmatprep.subr.mxu0 0.0
  %237 = vmatpush2.msra.mxu0 %v39
  %238 = vmatprep.mubr.f32.mxu0 %v15
  %239 = vmatmul.mubr.f32.gmra.mxu0 %v14
  %v240 = vpop.f32.mrf.mxu0
  %v241 = vadd.f32 %v172, %v240
  %v242 = vpop.f32.mrf.mxu0
  %243 = vdwg.mxu0
  %244 = vmatprep.subr.mxu0 0.0
  %245 = vmatpush1.msra.mxu0 %v70
  %246 = vmatprep.subr.mxu0 0.0
  %247 = vmatpush1.msra.mxu0 %v69
  %248 = vmatprep.subr.mxu0 0.0
  %249 = vmatpush1.msra.mxu0 %v68
  %250 = vmatprep.subr.mxu0 0.0
  %251 = vmatpush1.msra.mxu0 %v67
  %252 = vmatprep.subr.mxu0 0.0
  %253 = vmatpush1.msra.mxu0 %v66
  %254 = vmatprep.subr.mxu0 0.0
  %255 = vmatpush1.msra.mxu0 %v65
  %256 = vmatprep.subr.mxu0 0.0
  %257 = vmatpush1.msra.mxu0 %v64
  %258 = vmatprep.subr.mxu0 0.0
  %259 = vmatpush1.msra.mxu0 %v63
  %260 = vmatprep.subr.mxu0 0.0
  %261 = vmatpush1.msra.mxu0 %v62
  %262 = vmatprep.subr.mxu0 0.0
  %263 = vmatpush1.msra.mxu0 %v61
  %264 = vmatprep.subr.mxu0 0.0
  %265 = vmatpush1.msra.mxu0 %v60
  %266 = vmatprep.subr.mxu0 0.0
  %267 = vmatpush1.msra.mxu0 %v59
  %268 = vmatprep.subr.mxu0 0.0
  %269 = vmatpush1.msra.mxu0 %v58
  %270 = vmatprep.subr.mxu0 0.0
  %271 = vmatpush1.msra.mxu0 %v57
  %272 = vmatprep.subr.mxu0 0.0
  %273 = vmatpush1.msra.mxu0 %v56
  %274 = vmatprep.subr.mxu0 0.0
  %275 = vmatpush1.msra.mxu0 %v55
  %276 = vmatprep.subr.mxu0 0.0
  %277 = vmatpush2.msra.mxu0 %v86
  %278 = vmatprep.subr.mxu0 0.0
  %279 = vmatpush2.msra.mxu0 %v85
  %280 = vmatprep.subr.mxu0 0.0
  %281 = vmatpush2.msra.mxu0 %v84
  %282 = vmatprep.subr.mxu0 0.0
  %283 = vmatpush2.msra.mxu0 %v83
  %284 = vmatprep.subr.mxu0 0.0
  %285 = vmatpush2.msra.mxu0 %v82
  %286 = vmatprep.subr.mxu0 0.0
  %287 = vmatpush2.msra.mxu0 %v81
  %288 = vmatprep.subr.mxu0 0.0
  %289 = vmatpush2.msra.mxu0 %v80
  %290 = vmatprep.subr.mxu0 0.0
  %291 = vmatpush2.msra.mxu0 %v79
  %292 = vmatprep.subr.mxu0 0.0
  %293 = vmatpush2.msra.mxu0 %v78
  %294 = vmatprep.subr.mxu0 0.0
  %295 = vmatpush2.msra.mxu0 %v77
  %296 = vmatprep.subr.mxu0 0.0
  %297 = vmatpush2.msra.mxu0 %v76
  %298 = vmatprep.subr.mxu0 0.0
  %299 = vmatpush2.msra.mxu0 %v75
  %300 = vmatprep.subr.mxu0 0.0
  %301 = vmatpush2.msra.mxu0 %v74
  %302 = vmatprep.subr.mxu0 0.0
  %303 = vmatpush2.msra.mxu0 %v73
  %304 = vmatprep.subr.mxu0 0.0
  %305 = vmatpush2.msra.mxu0 %v72
  %306 = vmatprep.subr.mxu0 0.0
  %307 = vmatpush2.msra.mxu0 %v71
  %308 = vmatprep.mubr.f32.mxu0 %v17
  %309 = vmatmul.mubr.f32.gmra.mxu0 %v16
  %v310 = vpop.f32.mrf.mxu0
  %v311 = vadd.f32 %v241, %v310
  %v312 = vpop.f32.mrf.mxu0
  %313 = vdwg.mxu0
  %314 = vmatprep.subr.mxu0 0.0
  %315 = vmatpush1.msra.mxu0 %v102
  %316 = vmatprep.subr.mxu0 0.0
  %317 = vmatpush1.msra.mxu0 %v101
  %318 = vmatprep.subr.mxu0 0.0
  %319 = vmatpush1.msra.mxu0 %v100
  %320 = vmatprep.subr.mxu0 0.0
  %321 = vmatpush1.msra.mxu0 %v99
  %322 = vmatprep.subr.mxu0 0.0
  %323 = vmatpush1.msra.mxu0 %v98
  %324 = vmatprep.subr.mxu0 0.0
  %325 = vmatpush1.msra.mxu0 %v97
  %326 = vmatprep.subr.mxu0 0.0
  %327 = vmatpush1.msra.mxu0 %v96
  %328 = vmatprep.subr.mxu0 0.0
  %329 = vmatpush1.msra.mxu0 %v95
  %330 = vmatprep.subr.mxu0 0.0
  %331 = vmatpush1.msra.mxu0 %v94
  %332 = vmatprep.subr.mxu0 0.0
  %333 = vmatpush1.msra.mxu0 %v93
  %334 = vmatprep.subr.mxu0 0.0
  %335 = vmatpush1.msra.mxu0 %v92
  %336 = vmatprep.subr.mxu0 0.0
  %337 = vmatpush1.msra.mxu0 %v91
  %338 = vmatprep.subr.mxu0 0.0
  %339 = vmatpush1.msra.mxu0 %v90
  %340 = vmatprep.subr.mxu0 0.0
  %341 = vmatpush1.msra.mxu0 %v89
  %342 = vmatprep.subr.mxu0 0.0
  %343 = vmatpush1.msra.mxu0 %v88
  %344 = vmatprep.subr.mxu0 0.0
  %345 = vmatpush1.msra.mxu0 %v87
  %346 = vmatprep.subr.mxu0 0.0
  %347 = vmatpush2.msra.mxu0 %v118
  %348 = vmatprep.subr.mxu0 0.0
  %349 = vmatpush2.msra.mxu0 %v117
  %350 = vmatprep.subr.mxu0 0.0
  %351 = vmatpush2.msra.mxu0 %v116
  %352 = vmatprep.subr.mxu0 0.0
  %353 = vmatpush2.msra.mxu0 %v115
  %354 = vmatprep.subr.mxu0 0.0
  %355 = vmatpush2.msra.mxu0 %v114
  %356 = vmatprep.subr.mxu0 0.0
  %357 = vmatpush2.msra.mxu0 %v113
  %358 = vmatprep.subr.mxu0 0.0
  %359 = vmatpush2.msra.mxu0 %v112
  %360 = vmatprep.subr.mxu0 0.0
  %361 = vmatpush2.msra.mxu0 %v111
  %362 = vmatprep.subr.mxu0 0.0
  %363 = vmatpush2.msra.mxu0 %v110
  %364 = vmatprep.subr.mxu0 0.0
  %365 = vmatpush2.msra.mxu0 %v109
  %366 = vmatprep.subr.mxu0 0.0
  %367 = vmatpush2.msra.mxu0 %v108
  %368 = vmatprep.subr.mxu0 0.0
  %369 = vmatpush2.msra.mxu0 %v107
  %370 = vmatprep.subr.mxu0 0.0
  %371 = vmatpush2.msra.mxu0 %v106
  %372 = vmatprep.subr.mxu0 0.0
  %373 = vmatpush2.msra.mxu0 %v105
  %374 = vmatprep.subr.mxu0 0.0
  %375 = vmatpush2.msra.mxu0 %v104
  %376 = vmatprep.subr.mxu0 0.0
  %377 = vmatpush2.msra.mxu0 %v103
  %378 = vmatprep.mubr.f32.mxu0 %v19
  %379 = vmatmul.mubr.f32.gmra.mxu0 %v18
  %v380 = vpop.f32.mrf.mxu0
  %v381 = vadd.f32 %v311, %v380
  %v382 = vpop.f32.mrf.mxu0
  %383 = vdwg.mxu0
  %384 = vmatprep.subr.mxu0 0.0
  %385 = vmatpush1.msra.mxu0 %v134
  %386 = vmatprep.subr.mxu0 0.0
  %387 = vmatpush1.msra.mxu0 %v133
  %388 = vmatprep.subr.mxu0 0.0
  %389 = vmatpush1.msra.mxu0 %v132
  %390 = vmatprep.subr.mxu0 0.0
  %391 = vmatpush1.msra.mxu0 %v131
  %392 = vmatprep.subr.mxu0 0.0
  %393 = vmatpush1.msra.mxu0 %v130
  %394 = vmatprep.subr.mxu0 0.0
  %395 = vmatpush1.msra.mxu0 %v129
  %396 = vmatprep.subr.mxu0 0.0
  %397 = vmatpush1.msra.mxu0 %v128
  %398 = vmatprep.subr.mxu0 0.0
  %399 = vmatpush1.msra.mxu0 %v127
  %400 = vmatprep.subr.mxu0 0.0
  %401 = vmatpush1.msra.mxu0 %v126
  %402 = vmatprep.subr.mxu0 0.0
  %403 = vmatpush1.msra.mxu0 %v125
  %404 = vmatprep.subr.mxu0 0.0
  %405 = vmatpush1.msra.mxu0 %v124
  %406 = vmatprep.subr.mxu0 0.0
  %407 = vmatpush1.msra.mxu0 %v123
  %408 = vmatprep.subr.mxu0 0.0
  %409 = vmatpush1.msra.mxu0 %v122
  %410 = vmatprep.subr.mxu0 0.0
  %411 = vmatpush1.msra.mxu0 %v121
  %412 = vmatprep.subr.mxu0 0.0
  %413 = vmatpush1.msra.mxu0 %v120
  %414 = vmatprep.subr.mxu0 0.0
  %415 = vmatpush1.msra.mxu0 %v119
  %416 = vmatprep.subr.mxu0 0.0
  %417 = vmatpush2.msra.mxu0 %v150
  %418 = vmatprep.subr.mxu0 0.0
  %419 = vmatpush2.msra.mxu0 %v149
  %420 = vmatprep.subr.mxu0 0.0
  %421 = vmatpush2.msra.mxu0 %v148
  %422 = vmatprep.subr.mxu0 0.0
  %423 = vmatpush2.msra.mxu0 %v147
  %424 = vmatprep.subr.mxu0 0.0
  %425 = vmatpush2.msra.mxu0 %v146
  %426 = vmatprep.subr.mxu0 0.0
  %427 = vmatpush2.msra.mxu0 %v145
  %428 = vmatprep.subr.mxu0 0.0
  %429 = vmatpush2.msra.mxu0 %v144
  %430 = vmatprep.subr.mxu0 0.0
  %431 = vmatpush2.msra.mxu0 %v143
  %432 = vmatprep.subr.mxu0 0.0
  %433 = vmatpush2.msra.mxu0 %v142
  %434 = vmatprep.subr.mxu0 0.0
  %435 = vmatpush2.msra.mxu0 %v141
  %436 = vmatprep.subr.mxu0 0.0
  %437 = vmatpush2.msra.mxu0 %v140
  %438 = vmatprep.subr.mxu0 0.0
  %439 = vmatpush2.msra.mxu0 %v139
  %440 = vmatprep.subr.mxu0 0.0
  %441 = vmatpush2.msra.mxu0 %v138
  %442 = vmatprep.subr.mxu0 0.0
  %443 = vmatpush2.msra.mxu0 %v137
  %444 = vmatprep.subr.mxu0 0.0
  %445 = vmatpush2.msra.mxu0 %v136
  %446 = vmatprep.subr.mxu0 0.0
  %447 = vmatpush2.msra.mxu0 %v135
  %448 = vmatprep.mubr.f32.mxu0 %v21
  %449 = vmatmul.mubr.f32.gmra.mxu0 %v20
  %v450 = vpop.f32.mrf.mxu0
  %v451 = vadd.f32 %v381, %v450
  %v452 = vpop.f32.mrf.mxu0
  %453 = vdwg.mxu0
  %454 = vmatprep.subr.mxu0 0.0
  %455 = vmatpush1.msra.mxu0 %v166
  %456 = vmatprep.subr.mxu0 0.0
  %457 = vmatpush1.msra.mxu0 %v165
  %458 = vmatprep.subr.mxu0 0.0
  %459 = vmatpush1.msra.mxu0 %v164
  %460 = vmatprep.subr.mxu0 0.0
  %461 = vmatpush1.msra.mxu0 %v163
  %462 = vmatprep.subr.mxu0 0.0
  %463 = vmatpush1.msra.mxu0 %v162
  %464 = vmatprep.subr.mxu0 0.0
  %465 = vmatpush1.msra.mxu0 %v161
  %466 = vmatprep.subr.mxu0 0.0
  %467 = vmatpush1.msra.mxu0 %v160
  %468 = vmatprep.subr.mxu0 0.0
  %469 = vmatpush1.msra.mxu0 %v159
  %470 = vmatprep.subr.mxu0 0.0
  %471 = vmatpush1.msra.mxu0 %v158
  %472 = vmatprep.subr.mxu0 0.0
  %473 = vmatpush1.msra.mxu0 %v157
  %474 = vmatprep.subr.mxu0 0.0
  %475 = vmatpush1.msra.mxu0 %v156
  %476 = vmatprep.subr.mxu0 0.0
  %477 = vmatpush1.msra.mxu0 %v155
  %478 = vmatprep.subr.mxu0 0.0
  %479 = vmatpush1.msra.mxu0 %v154
  %480 = vmatprep.subr.mxu0 0.0
  %481 = vmatpush1.msra.mxu0 %v153
  %482 = vmatprep.subr.mxu0 0.0
  %483 = vmatpush1.msra.mxu0 %v152
  %484 = vmatprep.subr.mxu0 0.0
  %485 = vmatpush1.msra.mxu0 %v151
  %486 = vmatprep.subr.mxu0 0.0
  %487 = vmatpush2.msra.mxu0 0.0
  %488 = vmatprep.subr.mxu0 0.0
  %489 = vmatpush2.msra.mxu0 0.0
  %490 = vmatprep.subr.mxu0 0.0
  %491 = vmatpush2.msra.mxu0 0.0
  %492 = vmatprep.subr.mxu0 0.0
  %493 = vmatpush2.msra.mxu0 0.0
  %494 = vmatprep.subr.mxu0 0.0
  %495 = vmatpush2.msra.mxu0 0.0
  %496 = vmatprep.subr.mxu0 0.0
  %497 = vmatpush2.msra.mxu0 0.0
  %498 = vmatprep.subr.mxu0 0.0
  %499 = vmatpush2.msra.mxu0 0.0
  %500 = vmatprep.subr.mxu0 0.0
  %501 = vmatpush2.msra.mxu0 0.0
  %502 = vmatprep.subr.mxu0 0.0
  %503 = vmatpush2.msra.mxu0 0.0
  %504 = vmatprep.subr.mxu0 0.0
  %505 = vmatpush2.msra.mxu0 0.0
  %506 = vmatprep.subr.mxu0 0.0
  %507 = vmatpush2.msra.mxu0 0.0
  %508 = vmatprep.subr.mxu0 0.0
  %509 = vmatpush2.msra.mxu0 0.0
  %510 = vmatprep.subr.mxu0 0.0
  %511 = vmatpush2.msra.mxu0 0.0
  %512 = vmatprep.subr.mxu0 0.0
  %513 = vmatpush2.msra.mxu0 0.0
  %514 = vmatprep.subr.mxu0 0.0
  %515 = vmatpush2.msra.mxu0 0.0
  %516 = vmatprep.subr.mxu0 0.0
  %517 = vmatpush2.msra.mxu0 0.0
  %518 = vmatprep.mubr.f32.mxu0 0.0
  %519 = vmatmul.mubr.f32.gmra.mxu0 %v22
  %v520 = vpop.f32.mrf.mxu0
  %v521 = vadd.f32 %v451, %v520
  %v522 = vpop.f32.mrf.mxu0
  %523 = vdwg.mxu0
  %vm524 = vcmask 80896
  %v525 = vsel %vm524, %v521, -inf
  %526 = vmax.xlane.f32.xlu0 %v525
  %v527 = vpop.xlane.xlu0 %526
  %v528 = vsub.f32 %v521, %v527
  %v529 = vmul.f32 %v528, 1.442695
  %v530 = vpow.pop %v529
  %v531 = vsel %vm524, %v530, 0.0
  %532 = vadd.xlane.f32.xlu0 %v531
  %v533 = vpop.xlane.xlu0 %532
  %v534 = vlog2.pop %v533
  %v535 = vmul.f32 %v534, 0.6931472
  %v536 = vadd.f32 %v535, %v527
  %v537 = vsub.f32 %v521, %v536
  %538 = vst.msk [vmem:[%s3] sm:$0xff] %vm524, %v537
  // Predicated region
  $region14: #{net1_forward.5} parent=0 // pred_check
    _
  $region15: #{net1_forward.5} parent=0 // pred_check_branch
    %540 = sbr.rel (0) target = $region17
  $region16: #{net1_forward.5} parent=0 // pred_region
    _
  $region17: #{net1_forward.5} parent=0 // pred_fallthru
    _
  // Predicated region
  $region18: #{net1_forward.5} parent=0 // pred_check
    _
  $region19: #{net1_forward.5} parent=0 // pred_check_branch
    %542 = sbr.rel (0) target = $region21
  $region20: #{net1_forward.5} parent=0 // pred_region
    _
  $region21: #{net1_forward.5} parent=0 // pred_fallthru
    _

</llo_original>
